<compile_context>
chip_gen: v6e
topology: v6e:2x2x1
jax: 0.10.0
libtpu: 0.0.40
codegen_flags: <defaults>
</compile_context>

<pallas_src>
import numpy as np
import jax
import jax.numpy as jnp
from jax.experimental import pallas as pl
from jax.experimental.pallas import tpu as pltpu

EPS = 1e-5


def _spectral_attention_kernel(x_ref, wq_ref, bq_ref, wk_ref, bk_ref, wv_ref, bv_ref,
                               filt_ref, ablk_ref, bg_ref, hblk_ref, tril_ref,
                               e1_ref, e2_ref, kvsf_ref, p_ref, wo_ref, bo_ref,
                               out_ref, knpad_ref, vnpad_ref):
    f32 = jnp.float32
    x = x_ref[0]                                   # [L, D]
    L, D = x.shape

    hblk = hblk_ref[...]                           # [D, D] per-head block indicator
    tril = tril_ref[...]                           # [L, L] causal mask (lower triangular)

    # ---- fused q/k/v projections for all heads: [L,D] x [D,D] ----
    q = jnp.dot(x, wq_ref[...], preferred_element_type=f32) + bq_ref[...]
    k = jnp.dot(x, wk_ref[...], preferred_element_type=f32) + bk_ref[...]
    v = jnp.dot(x, wv_ref[...], preferred_element_type=f32) + bv_ref[...]

    # ---- per-head l2 normalization, lane-dense via block-diagonal pooling matmul ----
    def l2n(t):
        ss = jnp.dot(t * t, hblk, preferred_element_type=f32)   # per-head ||.||^2, broadcast over D
        return t / jnp.maximum(jnp.sqrt(ss), EPS)

    kn = l2n(k)
    vn = l2n(v)

    # ---- causal depthwise conv along L (== fftconvolve(...)[:L]) ----
    # filters are precomputed in the wrapper (weight-only).  out[l,d] = sum_{s<=l} filt[s,d]*u[l-s,d]
    filt = filt_ref[...]                            # [L, D]
    knpad_ref[0:L, :] = jnp.zeros((L, D), f32)
    knpad_ref[L:2 * L, :] = kn
    vnpad_ref[0:L, :] = jnp.zeros((L, D), f32)
    vnpad_ref[L:2 * L, :] = vn
    kf = jnp.zeros((L, D), f32)
    vf = jnp.zeros((L, D), f32)
    for s in range(L):                              # static unroll, L is small
        frow = filt[s:s + 1, :]
        kf = kf + frow * knpad_ref[L - s:2 * L - s, :]
        vf = vf + frow * vnpad_ref[L - s:2 * L - s, :]

    # ---- gating: logits_j[l] = sum_{d,e} vf_j[l,d]*kf_j[l,e]*(kvs*Wg)[d,e] + bg ----
    # ablk is the block-diagonal (kvs*Wg); hblk pools within a head and rebroadcasts over D.
    w = jnp.dot(vf, ablk_ref[...], preferred_element_type=f32) * kf          # [L, D]
    logits = jnp.dot(w, hblk, preferred_element_type=f32) + bg_ref[0]        # [L, D]
    gates = jnp.maximum(logits, 0.0) ** 2 + EPS                              # [L, D]

    # ---- causal cumulative sums via tril matmul ----
    g_scan = jnp.dot(tril, gates, preferred_element_type=f32)                # [L, D]
    denom = jnp.maximum(g_scan, EPS)

    # ---- flattened per-head outer products: column index = j*h*h + d*h + e ----
    # Zflat[t, (j,d,e)] = gates_j[t]*vf[t,j*h+d]*kf[t,j*h+e]; S = causal cumsum of Zflat.
    vg = gates * vf
    zflat = (jnp.dot(vg, e1_ref[...], preferred_element_type=f32)
             * jnp.dot(kf, e2_ref[...], preferred_element_type=f32))         # [L, H*h*h]
    s_scan = jnp.dot(tril, zflat, preferred_element_type=f32)                # [L, H*h*h]

    # num[l, j*h+e] = sum_d q[l,j*h+d]*kvs[d,e]*S[l,(j,d,e)]
    q_e = jnp.dot(q, e1_ref[...], preferred_element_type=f32) * kvsf_ref[...]
    num = jnp.dot(q_e * s_scan, p_ref[...], preferred_element_type=f32)      # [L, D]

    # (the m/s/n branches of the original scan never reach the module output -> omitted)
    sp = l2n(num / denom)                                                    # [L, D]

    # ---- output projection, single [L,D] x [D,D] matmul, single store per batch ----
    out_ref[0] = (jnp.dot(sp, wo_ref[...], preferred_element_type=f32)
                  + bo_ref[...]).astype(out_ref.dtype)


def spectral_attention_forward(x, params, num_heads):
    B, L, D = x.shape
    H = num_heads
    h = D // H
    HH = H * h * h
    f32 = jnp.float32

    WqT = params["Wq"].T.astype(f32)
    WkT = params["Wk"].T.astype(f32)
    WvT = params["Wv"].T.astype(f32)
    WoT = params["Wo"].T.astype(f32)
    bq = params["bq"].reshape(1, D)
    bk = params["bk"].reshape(1, D)
    bv = params["bv"].reshape(1, D)
    bo = params["bo"].reshape(1, D)

    # weight-only precompute, hoisted out of the kernel:
    filt = (params["basis"] @ params["Wtd"].T + params["btd"]).astype(f32)          # [L, D]

    kvs = params["kv_scale"].reshape(h, h)
    Wg = params["Wg"].reshape(h, h)
    Wg_scaled = kvs * Wg                                                             # fold kv_norm_scale
    A_blk = jax.scipy.linalg.block_diag(*([Wg_scaled] * H)).astype(f32)              # [D, D]
    head_blk = jax.scipy.linalg.block_diag(*([jnp.ones((h, h), f32)] * H))           # [D, D]
    bg = params["bg"].reshape(1).astype(f32)

    tril = jnp.tril(jnp.ones((L, L), f32))                                           # causal mask

    # expansion / pooling constants for the flattened outer product, col = j*h*h + d*h + e
    E1 = np.zeros((D, HH), np.float32)   # repeats feature (j,d) across e
    E2 = np.zeros((D, HH), np.float32)   # repeats feature (j,e) across d
    for j in range(H):
        for d in range(h):
            for e in range(h):
                c = j * h * h + d * h + e
                E1[j * h + d, c] = 1.0
                E2[j * h + e, c] = 1.0
    P = E2.T.copy()                                                                   # pools over d
    kvs_flat = jnp.tile(kvs.reshape(-1), (H,)).reshape(1, HH).astype(f32)

    fixed2 = lambda b: (0, 0)

    return pl.pallas_call(
        _spectral_attention_kernel,
        out_shape=jax.ShapeDtypeStruct((B, L, D), jnp.float32),
        grid_spec=pltpu.PrefetchScalarGridSpec(
            num_scalar_prefetch=0,
            grid=(B,),
            in_specs=[
                pl.BlockSpec((1, L, D), lambda b: (b, 0, 0)),           # x
                pl.BlockSpec((D, D), fixed2),                           # Wq^T
                pl.BlockSpec((1, D), fixed2),                           # bq
                pl.BlockSpec((D, D), fixed2),                           # Wk^T
                pl.BlockSpec((1, D), fixed2),                           # bk
                pl.BlockSpec((D, D), fixed2),                           # Wv^T
                pl.BlockSpec((1, D), fixed2),                           # bv
                pl.BlockSpec((L, D), fixed2),                           # precomputed spectral filters
                pl.BlockSpec((D, D), fixed2),                           # block-diag (kvs*Wg)
                pl.BlockSpec(memory_space=pltpu.MemorySpace.SMEM),      # bg scalar
                pl.BlockSpec((D, D), fixed2),                           # per-head block indicator
                pl.BlockSpec((L, L), fixed2),                           # causal tril
                pl.BlockSpec((D, HH), fixed2),                          # E1 expansion
                pl.BlockSpec((D, HH), fixed2),                          # E2 expansion
                pl.BlockSpec((1, HH), fixed2),                          # kvs flattened per column
                pl.BlockSpec((HH, D), fixed2),                          # pooling over d
                pl.BlockSpec((D, D), fixed2),                           # Wo^T
                pl.BlockSpec((1, D), fixed2),                           # bo
            ],
            out_specs=pl.BlockSpec((1, L, D), lambda b: (b, 0, 0)),
            scratch_shapes=[pltpu.VMEM((2 * L, D), jnp.float32),        # zero-padded kn
                            pltpu.VMEM((2 * L, D), jnp.float32)],       # zero-padded vn
        ),
        compiler_params=pltpu.CompilerParams(
            dimension_semantics=("parallel",)),
    )(x, WqT, bq, WkT, bk, WvT, bv, filt, A_blk, bg, head_blk, tril,
      jnp.asarray(E1), jnp.asarray(E2), kvs_flat, jnp.asarray(P), WoT, bo)


def reference_forward(x, p, num_heads):
    """Pure-JAX transcription of SpectralAttention.forward (use_tensordot=True)."""
    B, L, D = x.shape
    H = num_heads
    h = D // H
    lin = lambda t, W, b: t @ W.T + b

    q = lin(x, p["Wq"], p["bq"]).reshape(B, L, H, h).transpose(0, 2, 1, 3)
    k = lin(x, p["Wk"], p["bk"]).reshape(B, L, H, h).transpose(0, 2, 1, 3)
    v = lin(x, p["Wv"], p["bv"]).reshape(B, L, H, h).transpose(0, 2, 1, 3)

    def l2n(t):
        return t / jnp.maximum(jnp.sqrt(jnp.sum(t * t, -1, keepdims=True)), EPS)

    kn, vn = l2n(k), l2n(v)
    filters = lin(p["basis"], p["Wtd"], p["btd"])                 # [L, D]
    filt = filters.reshape(L, H, h).transpose(1, 0, 2)            # [H, L, h]

    def causal_conv(u):                                           # u: [B, H, L, h]
        out = jnp.zeros_like(u)
        for s in range(L):
            shifted = jnp.pad(u, ((0, 0), (0, 0), (s, 0), (0, 0)))[:, :, :L, :]
            out = out + filt[None, :, s:s + 1, :] * shifted
        return out

    kf, vf = causal_conv(kn), causal_conv(vn)
    Z = jnp.einsum("bhld,bhle->bhlde", vf, kf) * p["kv_scale"]
    gate_in = Z.reshape(B, H, L, h * h)
    logits = gate_in @ p["Wg"].T + p["bg"]
    gates = jnp.maximum(logits, 0.0) ** 2 + EPS                   # [B,H,L,1]
    gates5 = gates[..., None]
    gated_Z = gates5 * Z
    Z_scan = jnp.cumsum(gated_Z, axis=2)
    g_scan = jnp.cumsum(gates5, axis=2)
    state = Z_scan / jnp.maximum(g_scan, EPS)
    sp = jnp.einsum("bhld,bhlde->bhle", q, state)
    sp = l2n(sp)
    sp = sp.transpose(0, 2, 1, 3).reshape(B, L, D)
    return lin(sp, p["Wo"], p["bo"])


def init_params(key, dim, num_heads):
    h = dim // num_heads
    keys = jax.random.split(key, 12)
    scale = 0.1
    w = lambda k, shape: jax.random.normal(k, shape, jnp.float32) * scale
    return dict(
        Wq=w(keys[0], (dim, dim)), bq=w(keys[1], (dim,)),
        Wk=w(keys[2], (dim, dim)), bk=w(keys[3], (dim,)),
        Wv=w(keys[4], (dim, dim)), bv=w(keys[5], (dim,)),
        Wo=w(keys[6], (dim, dim)), bo=w(keys[7], (dim,)),
        Wtd=w(keys[8], (dim, dim)), btd=w(keys[9], (dim,)),
        Wg=w(keys[10], (1, h * h)), bg=w(keys[11], (1,)),
        kv_scale=jnp.ones((1, 1, 1, h, h), jnp.float32),   # module __init__ value
        # qk_norm_scale and gate_proj exist in __init__ but never affect forward()'s output.
    )


if __name__ == "__main__":
    B, L, DIM, HEADS = 2, 8, 32, 4
    key = jax.random.PRNGKey(0)
    k_x, k_p, k_b = jax.random.split(key, 3)

    x = jax.random.normal(k_x, (B, L, DIM), jnp.float32)
    params = init_params(k_p, DIM, HEADS)
    params["basis"] = jax.random.normal(k_b, (L, DIM), jnp.float32)   # spectral_basis [L, D]

    out = spectral_attention_forward(x, params, num_heads=HEADS)
    out = jax.block_until_ready(out)

    ref = reference_forward(x, params, num_heads=HEADS)
    np.testing.assert_allclose(np.asarray(out), np.asarray(ref), rtol=1e-2, atol=1e-2)
    print("KERNEL_OK")
</pallas_src>

<mosaic_0001>
module attributes {stable_mosaic.version = 11 : i64} {
  func.func @_spectral_attention_kernel(%arg0: i32, %arg1: memref<1x8x32xf32, #tpu.memory_space<vmem>>, %arg2: memref<32x32xf32, #tpu.memory_space<vmem>>, %arg3: memref<1x32xf32, #tpu.memory_space<vmem>>, %arg4: memref<32x32xf32, #tpu.memory_space<vmem>>, %arg5: memref<1x32xf32, #tpu.memory_space<vmem>>, %arg6: memref<32x32xf32, #tpu.memory_space<vmem>>, %arg7: memref<1x32xf32, #tpu.memory_space<vmem>>, %arg8: memref<8x32xf32, #tpu.memory_space<vmem>>, %arg9: memref<32x32xf32, #tpu.memory_space<vmem>>, %arg10: memref<1xf32, #tpu.memory_space<smem>>, %arg11: memref<32x32xf32, #tpu.memory_space<vmem>>, %arg12: memref<8x8xf32, #tpu.memory_space<vmem>>, %arg13: memref<32x256xf32, #tpu.memory_space<vmem>>, %arg14: memref<32x256xf32, #tpu.memory_space<vmem>>, %arg15: memref<1x256xf32, #tpu.memory_space<vmem>>, %arg16: memref<256x32xf32, #tpu.memory_space<vmem>>, %arg17: memref<32x32xf32, #tpu.memory_space<vmem>>, %arg18: memref<1x32xf32, #tpu.memory_space<vmem>>, %arg19: memref<1x8x32xf32, #tpu.memory_space<vmem>>, %arg20: memref<16x32xf32, #tpu.memory_space<vmem>>, %arg21: memref<16x32xf32, #tpu.memory_space<vmem>>) attributes {dimension_semantics = [#tpu.dimension_semantics<parallel>], iteration_bounds = array<i64: 2>, scalar_prefetch = 0 : i64, scratch_operands = 2 : i64, tpu.core_type = #tpu.core_type<tc>, window_params = [{transform_indices = @transform_0, window_bounds = array<i64: 1, 8, 32>}, {pipeline_mode = #tpu.pipeline_mode<synchronous>, transform_indices = @transform_1, window_bounds = array<i64: 32, 32>}, {pipeline_mode = #tpu.pipeline_mode<synchronous>, transform_indices = @transform_2, window_bounds = array<i64: 1, 32>}, {pipeline_mode = #tpu.pipeline_mode<synchronous>, transform_indices = @transform_3, window_bounds = array<i64: 32, 32>}, {pipeline_mode = #tpu.pipeline_mode<synchronous>, transform_indices = @transform_4, window_bounds = array<i64: 1, 32>}, {pipeline_mode = #tpu.pipeline_mode<synchronous>, transform_indices = @transform_5, window_bounds = array<i64: 32, 32>}, {pipeline_mode = #tpu.pipeline_mode<synchronous>, transform_indices = @transform_6, window_bounds = array<i64: 1, 32>}, {pipeline_mode = #tpu.pipeline_mode<synchronous>, transform_indices = @transform_7, window_bounds = array<i64: 8, 32>}, {pipeline_mode = #tpu.pipeline_mode<synchronous>, transform_indices = @transform_8, window_bounds = array<i64: 32, 32>}, {transform_indices = @transform_9, window_bounds = array<i64: 1>}, {pipeline_mode = #tpu.pipeline_mode<synchronous>, transform_indices = @transform_10, window_bounds = array<i64: 32, 32>}, {pipeline_mode = #tpu.pipeline_mode<synchronous>, transform_indices = @transform_11, window_bounds = array<i64: 8, 8>}, {pipeline_mode = #tpu.pipeline_mode<synchronous>, transform_indices = @transform_12, window_bounds = array<i64: 32, 256>}, {pipeline_mode = #tpu.pipeline_mode<synchronous>, transform_indices = @transform_13, window_bounds = array<i64: 32, 256>}, {pipeline_mode = #tpu.pipeline_mode<synchronous>, transform_indices = @transform_14, window_bounds = array<i64: 1, 256>}, {pipeline_mode = #tpu.pipeline_mode<synchronous>, transform_indices = @transform_15, window_bounds = array<i64: 256, 32>}, {pipeline_mode = #tpu.pipeline_mode<synchronous>, transform_indices = @transform_16, window_bounds = array<i64: 32, 32>}, {pipeline_mode = #tpu.pipeline_mode<synchronous>, transform_indices = @transform_17, window_bounds = array<i64: 1, 32>}, {transform_indices = @transform_18, window_bounds = array<i64: 1, 8, 32>}]} {
    %c0 = arith.constant 0 : index
    %c0_0 = arith.constant 0 : index
    %c0_1 = arith.constant 0 : index
    %0 = vector.load %arg1[%c0, %c0_0, %c0_1] : memref<1x8x32xf32, #tpu.memory_space<vmem>>, vector<1x8x32xf32>
    %1 = vector.shape_cast %0 : vector<1x8x32xf32> to vector<8x32xf32>
    %c0_2 = arith.constant 0 : index
    %c0_3 = arith.constant 0 : index
    %2 = vector.load %arg11[%c0_2, %c0_3] : memref<32x32xf32, #tpu.memory_space<vmem>>, vector<32x32xf32>
    %c0_4 = arith.constant 0 : index
    %c0_5 = arith.constant 0 : index
    %3 = vector.load %arg12[%c0_4, %c0_5] : memref<8x8xf32, #tpu.memory_space<vmem>>, vector<8x8xf32>
    %c0_6 = arith.constant 0 : index
    %c0_7 = arith.constant 0 : index
    %4 = vector.load %arg2[%c0_6, %c0_7] : memref<32x32xf32, #tpu.memory_space<vmem>>, vector<32x32xf32>
    %cst = arith.constant dense<0.000000e+00> : vector<8x32xf32>
    %5 = tpu.matmul %1, %4, %cst {dimension_numbers = #tpu.dot_dimension_numbers<[1], [0], [0], [1], [0, 0, 1, 1], [], []>} : vector<8x32xf32>, vector<32x32xf32>, vector<8x32xf32> -> vector<8x32xf32>
    %c0_8 = arith.constant 0 : index
    %c0_9 = arith.constant 0 : index
    %6 = vector.load %arg3[%c0_8, %c0_9] : memref<1x32xf32, #tpu.memory_space<vmem>>, vector<1x32xf32>
    %7 = vector.broadcast %6 : vector<1x32xf32> to vector<8x32xf32>
    %8 = arith.addf %5, %7 : vector<8x32xf32>
    %c0_10 = arith.constant 0 : index
    %c0_11 = arith.constant 0 : index
    %9 = vector.load %arg4[%c0_10, %c0_11] : memref<32x32xf32, #tpu.memory_space<vmem>>, vector<32x32xf32>
    %cst_12 = arith.constant dense<0.000000e+00> : vector<8x32xf32>
    %10 = tpu.matmul %1, %9, %cst_12 {dimension_numbers = #tpu.dot_dimension_numbers<[1], [0], [0], [1], [0, 0, 1, 1], [], []>} : vector<8x32xf32>, vector<32x32xf32>, vector<8x32xf32> -> vector<8x32xf32>
    %c0_13 = arith.constant 0 : index
    %c0_14 = arith.constant 0 : index
    %11 = vector.load %arg5[%c0_13, %c0_14] : memref<1x32xf32, #tpu.memory_space<vmem>>, vector<1x32xf32>
    %12 = vector.broadcast %11 : vector<1x32xf32> to vector<8x32xf32>
    %13 = arith.addf %10, %12 : vector<8x32xf32>
    %c0_15 = arith.constant 0 : index
    %c0_16 = arith.constant 0 : index
    %14 = vector.load %arg6[%c0_15, %c0_16] : memref<32x32xf32, #tpu.memory_space<vmem>>, vector<32x32xf32>
    %cst_17 = arith.constant dense<0.000000e+00> : vector<8x32xf32>
    %15 = tpu.matmul %1, %14, %cst_17 {dimension_numbers = #tpu.dot_dimension_numbers<[1], [0], [0], [1], [0, 0, 1, 1], [], []>} : vector<8x32xf32>, vector<32x32xf32>, vector<8x32xf32> -> vector<8x32xf32>
    %c0_18 = arith.constant 0 : index
    %c0_19 = arith.constant 0 : index
    %16 = vector.load %arg7[%c0_18, %c0_19] : memref<1x32xf32, #tpu.memory_space<vmem>>, vector<1x32xf32>
    %17 = vector.broadcast %16 : vector<1x32xf32> to vector<8x32xf32>
    %18 = arith.addf %15, %17 : vector<8x32xf32>
    %19 = arith.mulf %13, %13 : vector<8x32xf32>
    %cst_20 = arith.constant dense<0.000000e+00> : vector<8x32xf32>
    %20 = tpu.matmul %19, %2, %cst_20 {dimension_numbers = #tpu.dot_dimension_numbers<[1], [0], [0], [1], [0, 0, 1, 1], [], []>} : vector<8x32xf32>, vector<32x32xf32>, vector<8x32xf32> -> vector<8x32xf32>
    %21 = math.sqrt %20 : vector<8x32xf32>
    %cst_21 = arith.constant 9.99999974E-6 : f32
    %22 = vector.broadcast %cst_21 : f32 to vector<8x32xf32>
    %23 = arith.maximumf %21, %22 : vector<8x32xf32>
    %24 = arith.divf %13, %23 : vector<8x32xf32>
    %25 = arith.mulf %18, %18 : vector<8x32xf32>
    %cst_22 = arith.constant dense<0.000000e+00> : vector<8x32xf32>
    %26 = tpu.matmul %25, %2, %cst_22 {dimension_numbers = #tpu.dot_dimension_numbers<[1], [0], [0], [1], [0, 0, 1, 1], [], []>} : vector<8x32xf32>, vector<32x32xf32>, vector<8x32xf32> -> vector<8x32xf32>
    %27 = math.sqrt %26 : vector<8x32xf32>
    %cst_23 = arith.constant 9.99999974E-6 : f32
    %28 = vector.broadcast %cst_23 : f32 to vector<8x32xf32>
    %29 = arith.maximumf %27, %28 : vector<8x32xf32>
    %30 = arith.divf %18, %29 : vector<8x32xf32>
    %c0_24 = arith.constant 0 : index
    %c0_25 = arith.constant 0 : index
    %31 = vector.load %arg8[%c0_24, %c0_25] : memref<8x32xf32, #tpu.memory_space<vmem>>, vector<8x32xf32>
    %cst_26 = arith.constant 0.000000e+00 : f32
    %32 = vector.broadcast %cst_26 : f32 to vector<8x32xf32>
    %c0_27 = arith.constant 0 : index
    %c0_28 = arith.constant 0 : index
    %33 = vector.load %arg20[%c0_27, %c0_28] : memref<16x32xf32, #tpu.memory_space<vmem>>, vector<8x32xf32>
    tpu.vector_store %arg20[%c0_27, %c0_28], %32 {strides = array<i32>} : memref<16x32xf32, #tpu.memory_space<vmem>>, vector<8x32xf32>,
    %c8 = arith.constant 8 : index
    %c0_29 = arith.constant 0 : index
    %34 = vector.load %arg20[%c8, %c0_29] : memref<16x32xf32, #tpu.memory_space<vmem>>, vector<8x32xf32>
    tpu.vector_store %arg20[%c8, %c0_29], %24 {strides = array<i32>} : memref<16x32xf32, #tpu.memory_space<vmem>>, vector<8x32xf32>,
    %cst_30 = arith.constant 0.000000e+00 : f32
    %35 = vector.broadcast %cst_30 : f32 to vector<8x32xf32>
    %c0_31 = arith.constant 0 : index
    %c0_32 = arith.constant 0 : index
    %36 = vector.load %arg21[%c0_31, %c0_32] : memref<16x32xf32, #tpu.memory_space<vmem>>, vector<8x32xf32>
    tpu.vector_store %arg21[%c0_31, %c0_32], %35 {strides = array<i32>} : memref<16x32xf32, #tpu.memory_space<vmem>>, vector<8x32xf32>,
    %c8_33 = arith.constant 8 : index
    %c0_34 = arith.constant 0 : index
    %37 = vector.load %arg21[%c8_33, %c0_34] : memref<16x32xf32, #tpu.memory_space<vmem>>, vector<8x32xf32>
    tpu.vector_store %arg21[%c8_33, %c0_34], %30 {strides = array<i32>} : memref<16x32xf32, #tpu.memory_space<vmem>>, vector<8x32xf32>,
    %cst_35 = arith.constant 0.000000e+00 : f32
    %38 = vector.broadcast %cst_35 : f32 to vector<8x32xf32>
    %cst_36 = arith.constant 0.000000e+00 : f32
    %39 = vector.broadcast %cst_36 : f32 to vector<8x32xf32>
    %40 = vector.extract_strided_slice %31 {offsets = [0, 0], sizes = [1, 32], strides = [1, 1]} : vector<8x32xf32> to vector<1x32xf32>
    %c8_37 = arith.constant 8 : index
    %c0_38 = arith.constant 0 : index
    %41 = vector.load %arg20[%c8_37, %c0_38] : memref<16x32xf32, #tpu.memory_space<vmem>>, vector<8x32xf32>
    %42 = vector.broadcast %40 : vector<1x32xf32> to vector<8x32xf32>
    %43 = arith.mulf %42, %41 : vector<8x32xf32>
    %44 = arith.addf %38, %43 : vector<8x32xf32>
    %c8_39 = arith.constant 8 : index
    %c0_40 = arith.constant 0 : index
    %45 = vector.load %arg21[%c8_39, %c0_40] : memref<16x32xf32, #tpu.memory_space<vmem>>, vector<8x32xf32>
    %46 = vector.broadcast %40 : vector<1x32xf32> to vector<8x32xf32>
    %47 = arith.mulf %46, %45 : vector<8x32xf32>
    %48 = arith.addf %39, %47 : vector<8x32xf32>
    %49 = vector.extract_strided_slice %31 {offsets = [1, 0], sizes = [1, 32], strides = [1, 1]} : vector<8x32xf32> to vector<1x32xf32>
    %c7 = arith.constant 7 : index
    %c0_41 = arith.constant 0 : index
    %50 = vector.load %arg20[%c7, %c0_41] : memref<16x32xf32, #tpu.memory_space<vmem>>, vector<8x32xf32>
    %51 = vector.broadcast %49 : vector<1x32xf32> to vector<8x32xf32>
    %52 = arith.mulf %51, %50 : vector<8x32xf32>
    %53 = arith.addf %44, %52 : vector<8x32xf32>
    %c7_42 = arith.constant 7 : index
    %c0_43 = arith.constant 0 : index
    %54 = vector.load %arg21[%c7_42, %c0_43] : memref<16x32xf32, #tpu.memory_space<vmem>>, vector<8x32xf32>
    %55 = vector.broadcast %49 : vector<1x32xf32> to vector<8x32xf32>
    %56 = arith.mulf %55, %54 : vector<8x32xf32>
    %57 = arith.addf %48, %56 : vector<8x32xf32>
    %58 = vector.extract_strided_slice %31 {offsets = [2, 0], sizes = [1, 32], strides = [1, 1]} : vector<8x32xf32> to vector<1x32xf32>
    %c6 = arith.constant 6 : index
    %c0_44 = arith.constant 0 : index
    %59 = vector.load %arg20[%c6, %c0_44] : memref<16x32xf32, #tpu.memory_space<vmem>>, vector<8x32xf32>
    %60 = vector.broadcast %58 : vector<1x32xf32> to vector<8x32xf32>
    %61 = arith.mulf %60, %59 : vector<8x32xf32>
    %62 = arith.addf %53, %61 : vector<8x32xf32>
    %c6_45 = arith.constant 6 : index
    %c0_46 = arith.constant 0 : index
    %63 = vector.load %arg21[%c6_45, %c0_46] : memref<16x32xf32, #tpu.memory_space<vmem>>, vector<8x32xf32>
    %64 = vector.broadcast %58 : vector<1x32xf32> to vector<8x32xf32>
    %65 = arith.mulf %64, %63 : vector<8x32xf32>
    %66 = arith.addf %57, %65 : vector<8x32xf32>
    %67 = vector.extract_strided_slice %31 {offsets = [3, 0], sizes = [1, 32], strides = [1, 1]} : vector<8x32xf32> to vector<1x32xf32>
    %c5 = arith.constant 5 : index
    %c0_47 = arith.constant 0 : index
    %68 = vector.load %arg20[%c5, %c0_47] : memref<16x32xf32, #tpu.memory_space<vmem>>, vector<8x32xf32>
    %69 = vector.broadcast %67 : vector<1x32xf32> to vector<8x32xf32>
    %70 = arith.mulf %69, %68 : vector<8x32xf32>
    %71 = arith.addf %62, %70 : vector<8x32xf32>
    %c5_48 = arith.constant 5 : index
    %c0_49 = arith.constant 0 : index
    %72 = vector.load %arg21[%c5_48, %c0_49] : memref<16x32xf32, #tpu.memory_space<vmem>>, vector<8x32xf32>
    %73 = vector.broadcast %67 : vector<1x32xf32> to vector<8x32xf32>
    %74 = arith.mulf %73, %72 : vector<8x32xf32>
    %75 = arith.addf %66, %74 : vector<8x32xf32>
    %76 = vector.extract_strided_slice %31 {offsets = [4, 0], sizes = [1, 32], strides = [1, 1]} : vector<8x32xf32> to vector<1x32xf32>
    %c4 = arith.constant 4 : index
    %c0_50 = arith.constant 0 : index
    %77 = vector.load %arg20[%c4, %c0_50] : memref<16x32xf32, #tpu.memory_space<vmem>>, vector<8x32xf32>
    %78 = vector.broadcast %76 : vector<1x32xf32> to vector<8x32xf32>
    %79 = arith.mulf %78, %77 : vector<8x32xf32>
    %80 = arith.addf %71, %79 : vector<8x32xf32>
    %c4_51 = arith.constant 4 : index
    %c0_52 = arith.constant 0 : index
    %81 = vector.load %arg21[%c4_51, %c0_52] : memref<16x32xf32, #tpu.memory_space<vmem>>, vector<8x32xf32>
    %82 = vector.broadcast %76 : vector<1x32xf32> to vector<8x32xf32>
    %83 = arith.mulf %82, %81 : vector<8x32xf32>
    %84 = arith.addf %75, %83 : vector<8x32xf32>
    %85 = vector.extract_strided_slice %31 {offsets = [5, 0], sizes = [1, 32], strides = [1, 1]} : vector<8x32xf32> to vector<1x32xf32>
    %c3 = arith.constant 3 : index
    %c0_53 = arith.constant 0 : index
    %86 = vector.load %arg20[%c3, %c0_53] : memref<16x32xf32, #tpu.memory_space<vmem>>, vector<8x32xf32>
    %87 = vector.broadcast %85 : vector<1x32xf32> to vector<8x32xf32>
    %88 = arith.mulf %87, %86 : vector<8x32xf32>
    %89 = arith.addf %80, %88 : vector<8x32xf32>
    %c3_54 = arith.constant 3 : index
    %c0_55 = arith.constant 0 : index
    %90 = vector.load %arg21[%c3_54, %c0_55] : memref<16x32xf32, #tpu.memory_space<vmem>>, vector<8x32xf32>
    %91 = vector.broadcast %85 : vector<1x32xf32> to vector<8x32xf32>
    %92 = arith.mulf %91, %90 : vector<8x32xf32>
    %93 = arith.addf %84, %92 : vector<8x32xf32>
    %94 = vector.extract_strided_slice %31 {offsets = [6, 0], sizes = [1, 32], strides = [1, 1]} : vector<8x32xf32> to vector<1x32xf32>
    %c2 = arith.constant 2 : index
    %c0_56 = arith.constant 0 : index
    %95 = vector.load %arg20[%c2, %c0_56] : memref<16x32xf32, #tpu.memory_space<vmem>>, vector<8x32xf32>
    %96 = vector.broadcast %94 : vector<1x32xf32> to vector<8x32xf32>
    %97 = arith.mulf %96, %95 : vector<8x32xf32>
    %98 = arith.addf %89, %97 : vector<8x32xf32>
    %c2_57 = arith.constant 2 : index
    %c0_58 = arith.constant 0 : index
    %99 = vector.load %arg21[%c2_57, %c0_58] : memref<16x32xf32, #tpu.memory_space<vmem>>, vector<8x32xf32>
    %100 = vector.broadcast %94 : vector<1x32xf32> to vector<8x32xf32>
    %101 = arith.mulf %100, %99 : vector<8x32xf32>
    %102 = arith.addf %93, %101 : vector<8x32xf32>
    %103 = vector.extract_strided_slice %31 {offsets = [7, 0], sizes = [1, 32], strides = [1, 1]} : vector<8x32xf32> to vector<1x32xf32>
    %c1 = arith.constant 1 : index
    %c0_59 = arith.constant 0 : index
    %104 = vector.load %arg20[%c1, %c0_59] : memref<16x32xf32, #tpu.memory_space<vmem>>, vector<8x32xf32>
    %105 = vector.broadcast %103 : vector<1x32xf32> to vector<8x32xf32>
    %106 = arith.mulf %105, %104 : vector<8x32xf32>
    %107 = arith.addf %98, %106 : vector<8x32xf32>
    %c1_60 = arith.constant 1 : index
    %c0_61 = arith.constant 0 : index
    %108 = vector.load %arg21[%c1_60, %c0_61] : memref<16x32xf32, #tpu.memory_space<vmem>>, vector<8x32xf32>
    %109 = vector.broadcast %103 : vector<1x32xf32> to vector<8x32xf32>
    %110 = arith.mulf %109, %108 : vector<8x32xf32>
    %111 = arith.addf %102, %110 : vector<8x32xf32>
    %c0_62 = arith.constant 0 : index
    %c0_63 = arith.constant 0 : index
    %112 = vector.load %arg9[%c0_62, %c0_63] : memref<32x32xf32, #tpu.memory_space<vmem>>, vector<32x32xf32>
    %cst_64 = arith.constant dense<0.000000e+00> : vector<8x32xf32>
    %113 = tpu.matmul %111, %112, %cst_64 {dimension_numbers = #tpu.dot_dimension_numbers<[1], [0], [0], [1], [0, 0, 1, 1], [], []>} : vector<8x32xf32>, vector<32x32xf32>, vector<8x32xf32> -> vector<8x32xf32>
    %114 = arith.mulf %113, %107 : vector<8x32xf32>
    %cst_65 = arith.constant dense<0.000000e+00> : vector<8x32xf32>
    %115 = tpu.matmul %114, %2, %cst_65 {dimension_numbers = #tpu.dot_dimension_numbers<[1], [0], [0], [1], [0, 0, 1, 1], [], []>} : vector<8x32xf32>, vector<32x32xf32>, vector<8x32xf32> -> vector<8x32xf32>
    %c0_66 = arith.constant 0 : index
    %116 = memref.load %arg10[%c0_66] : memref<1xf32, #tpu.memory_space<smem>>
    %117 = vector.broadcast %116 : f32 to vector<8x32xf32>
    %118 = arith.addf %115, %117 : vector<8x32xf32>
    %cst_67 = arith.constant 0.000000e+00 : f32
    %119 = vector.broadcast %cst_67 : f32 to vector<8x32xf32>
    %120 = arith.maximumf %118, %119 : vector<8x32xf32>
    %121 = arith.mulf %120, %120 : vector<8x32xf32>
    %cst_68 = arith.constant 9.99999974E-6 : f32
    %122 = vector.broadcast %cst_68 : f32 to vector<8x32xf32>
    %123 = arith.addf %121, %122 : vector<8x32xf32>
    %cst_69 = arith.constant dense<0.000000e+00> : vector<8x32xf32>
    %124 = tpu.matmul %3, %123, %cst_69 {dimension_numbers = #tpu.dot_dimension_numbers<[1], [0], [0], [1], [0, 0, 1, 1], [], []>} : vector<8x8xf32>, vector<8x32xf32>, vector<8x32xf32> -> vector<8x32xf32>
    %cst_70 = arith.constant 9.99999974E-6 : f32
    %125 = vector.broadcast %cst_70 : f32 to vector<8x32xf32>
    %126 = arith.maximumf %124, %125 : vector<8x32xf32>
    %127 = arith.mulf %123, %111 : vector<8x32xf32>
    %c0_71 = arith.constant 0 : index
    %c0_72 = arith.constant 0 : index
    %128 = vector.load %arg13[%c0_71, %c0_72] : memref<32x256xf32, #tpu.memory_space<vmem>>, vector<32x256xf32>
    %cst_73 = arith.constant dense<0.000000e+00> : vector<8x256xf32>
    %129 = tpu.matmul %127, %128, %cst_73 {dimension_numbers = #tpu.dot_dimension_numbers<[1], [0], [0], [1], [0, 0, 1, 1], [], []>} : vector<8x32xf32>, vector<32x256xf32>, vector<8x256xf32> -> vector<8x256xf32>
    %c0_74 = arith.constant 0 : index
    %c0_75 = arith.constant 0 : index
    %130 = vector.load %arg14[%c0_74, %c0_75] : memref<32x256xf32, #tpu.memory_space<vmem>>, vector<32x256xf32>
    %cst_76 = arith.constant dense<0.000000e+00> : vector<8x256xf32>
    %131 = tpu.matmul %107, %130, %cst_76 {dimension_numbers = #tpu.dot_dimension_numbers<[1], [0], [0], [1], [0, 0, 1, 1], [], []>} : vector<8x32xf32>, vector<32x256xf32>, vector<8x256xf32> -> vector<8x256xf32>
    %132 = arith.mulf %129, %131 : vector<8x256xf32>
    %cst_77 = arith.constant dense<0.000000e+00> : vector<8x256xf32>
    %133 = tpu.matmul %3, %132, %cst_77 {dimension_numbers = #tpu.dot_dimension_numbers<[1], [0], [0], [1], [0, 0, 1, 1], [], []>} : vector<8x8xf32>, vector<8x256xf32>, vector<8x256xf32> -> vector<8x256xf32>
    %c0_78 = arith.constant 0 : index
    %c0_79 = arith.constant 0 : index
    %134 = vector.load %arg13[%c0_78, %c0_79] : memref<32x256xf32, #tpu.memory_space<vmem>>, vector<32x256xf32>
    %cst_80 = arith.constant dense<0.000000e+00> : vector<8x256xf32>
    %135 = tpu.matmul %8, %134, %cst_80 {dimension_numbers = #tpu.dot_dimension_numbers<[1], [0], [0], [1], [0, 0, 1, 1], [], []>} : vector<8x32xf32>, vector<32x256xf32>, vector<8x256xf32> -> vector<8x256xf32>
    %c0_81 = arith.constant 0 : index
    %c0_82 = arith.constant 0 : index
    %136 = vector.load %arg15[%c0_81, %c0_82] : memref<1x256xf32, #tpu.memory_space<vmem>>, vector<1x256xf32>
    %137 = vector.broadcast %136 : vector<1x256xf32> to vector<8x256xf32>
    %138 = arith.mulf %135, %137 : vector<8x256xf32>
    %139 = arith.mulf %138, %133 : vector<8x256xf32>
    %c0_83 = arith.constant 0 : index
    %c0_84 = arith.constant 0 : index
    %140 = vector.load %arg16[%c0_83, %c0_84] : memref<256x32xf32, #tpu.memory_space<vmem>>, vector<256x32xf32>
    %cst_85 = arith.constant dense<0.000000e+00> : vector<8x32xf32>
    %141 = tpu.matmul %139, %140, %cst_85 {dimension_numbers = #tpu.dot_dimension_numbers<[1], [0], [0], [1], [0, 0, 1, 1], [], []>} : vector<8x256xf32>, vector<256x32xf32>, vector<8x32xf32> -> vector<8x32xf32>
    %142 = arith.divf %141, %126 : vector<8x32xf32>
    %143 = arith.mulf %142, %142 : vector<8x32xf32>
    %cst_86 = arith.constant dense<0.000000e+00> : vector<8x32xf32>
    %144 = tpu.matmul %143, %2, %cst_86 {dimension_numbers = #tpu.dot_dimension_numbers<[1], [0], [0], [1], [0, 0, 1, 1], [], []>} : vector<8x32xf32>, vector<32x32xf32>, vector<8x32xf32> -> vector<8x32xf32>
    %145 = math.sqrt %144 : vector<8x32xf32>
    %cst_87 = arith.constant 9.99999974E-6 : f32
    %146 = vector.broadcast %cst_87 : f32 to vector<8x32xf32>
    %147 = arith.maximumf %145, %146 : vector<8x32xf32>
    %148 = arith.divf %142, %147 : vector<8x32xf32>
    %c0_88 = arith.constant 0 : index
    %c0_89 = arith.constant 0 : index
    %149 = vector.load %arg17[%c0_88, %c0_89] : memref<32x32xf32, #tpu.memory_space<vmem>>, vector<32x32xf32>
    %cst_90 = arith.constant dense<0.000000e+00> : vector<8x32xf32>
    %150 = tpu.matmul %148, %149, %cst_90 {dimension_numbers = #tpu.dot_dimension_numbers<[1], [0], [0], [1], [0, 0, 1, 1], [], []>} : vector<8x32xf32>, vector<32x32xf32>, vector<8x32xf32> -> vector<8x32xf32>
    %c0_91 = arith.constant 0 : index
    %c0_92 = arith.constant 0 : index
    %151 = vector.load %arg18[%c0_91, %c0_92] : memref<1x32xf32, #tpu.memory_space<vmem>>, vector<1x32xf32>
    %152 = vector.broadcast %151 : vector<1x32xf32> to vector<8x32xf32>
    %153 = arith.addf %150, %152 : vector<8x32xf32>
    %c0_93 = arith.constant 0 : index
    %c0_94 = arith.constant 0 : index
    %c0_95 = arith.constant 0 : index
    %154 = vector.load %arg19[%c0_93, %c0_94, %c0_95] : memref<1x8x32xf32, #tpu.memory_space<vmem>>, vector<1x8x32xf32>
    %155 = vector.shape_cast %154 : vector<1x8x32xf32> to vector<8x32xf32>
    %156 = vector.shape_cast %153 : vector<8x32xf32> to vector<1x8x32xf32>
    tpu.vector_store %arg19[%c0_93, %c0_94, %c0_95], %156 {strides = array<i32>} : memref<1x8x32xf32, #tpu.memory_space<vmem>>, vector<1x8x32xf32>,
    return
  }
  func.func @transform_0(%arg0: i32) -> (i32, i32, i32) {
    %c0_i32 = arith.constant 0 : i32
    %c0_i32_0 = arith.constant 0 : i32
    %c0_i32_1 = arith.constant 0 : i32
    return %arg0, %c0_i32, %c0_i32_0 : i32, i32, i32
  }
  func.func @transform_1(%arg0: i32) -> (i32, i32) {
    %c0_i32 = arith.constant 0 : i32
    %c0_i32_0 = arith.constant 0 : i32
    %c0_i32_1 = arith.constant 0 : i32
    return %c0_i32, %c0_i32_0 : i32, i32
  }
  func.func @transform_2(%arg0: i32) -> (i32, i32) {
    %c0_i32 = arith.constant 0 : i32
    %c0_i32_0 = arith.constant 0 : i32
    %c0_i32_1 = arith.constant 0 : i32
    return %c0_i32, %c0_i32_0 : i32, i32
  }
  func.func @transform_3(%arg0: i32) -> (i32, i32) {
    %c0_i32 = arith.constant 0 : i32
    %c0_i32_0 = arith.constant 0 : i32
    %c0_i32_1 = arith.constant 0 : i32
    return %c0_i32, %c0_i32_0 : i32, i32
  }
  func.func @transform_4(%arg0: i32) -> (i32, i32) {
    %c0_i32 = arith.constant 0 : i32
    %c0_i32_0 = arith.constant 0 : i32
    %c0_i32_1 = arith.constant 0 : i32
    return %c0_i32, %c0_i32_0 : i32, i32
  }
  func.func @transform_5(%arg0: i32) -> (i32, i32) {
    %c0_i32 = arith.constant 0 : i32
    %c0_i32_0 = arith.constant 0 : i32
    %c0_i32_1 = arith.constant 0 : i32
    return %c0_i32, %c0_i32_0 : i32, i32
  }
  func.func @transform_6(%arg0: i32) -> (i32, i32) {
    %c0_i32 = arith.constant 0 : i32
    %c0_i32_0 = arith.constant 0 : i32
    %c0_i32_1 = arith.constant 0 : i32
    return %c0_i32, %c0_i32_0 : i32, i32
  }
  func.func @transform_7(%arg0: i32) -> (i32, i32) {
    %c0_i32 = arith.constant 0 : i32
    %c0_i32_0 = arith.constant 0 : i32
    %c0_i32_1 = arith.constant 0 : i32
    return %c0_i32, %c0_i32_0 : i32, i32
  }
  func.func @transform_8(%arg0: i32) -> (i32, i32) {
    %c0_i32 = arith.constant 0 : i32
    %c0_i32_0 = arith.constant 0 : i32
    %c0_i32_1 = arith.constant 0 : i32
    return %c0_i32, %c0_i32_0 : i32, i32
  }
  func.func @transform_9(%arg0: i32) -> i32 {
    %c0_i32 = arith.constant 0 : i32
    %c0_i32_0 = arith.constant 0 : i32
    return %c0_i32 : i32
  }
  func.func @transform_10(%arg0: i32) -> (i32, i32) {
    %c0_i32 = arith.constant 0 : i32
    %c0_i32_0 = arith.constant 0 : i32
    %c0_i32_1 = arith.constant 0 : i32
    return %c0_i32, %c0_i32_0 : i32, i32
  }
  func.func @transform_11(%arg0: i32) -> (i32, i32) {
    %c0_i32 = arith.constant 0 : i32
    %c0_i32_0 = arith.constant 0 : i32
    %c0_i32_1 = arith.constant 0 : i32
    return %c0_i32, %c0_i32_0 : i32, i32
  }
  func.func @transform_12(%arg0: i32) -> (i32, i32) {
    %c0_i32 = arith.constant 0 : i32
    %c0_i32_0 = arith.constant 0 : i32
    %c0_i32_1 = arith.constant 0 : i32
    return %c0_i32, %c0_i32_0 : i32, i32
  }
  func.func @transform_13(%arg0: i32) -> (i32, i32) {
    %c0_i32 = arith.constant 0 : i32
    %c0_i32_0 = arith.constant 0 : i32
    %c0_i32_1 = arith.constant 0 : i32
    return %c0_i32, %c0_i32_0 : i32, i32
  }
  func.func @transform_14(%arg0: i32) -> (i32, i32) {
    %c0_i32 = arith.constant 0 : i32
    %c0_i32_0 = arith.constant 0 : i32
    %c0_i32_1 = arith.constant 0 : i32
    return %c0_i32, %c0_i32_0 : i32, i32
  }
  func.func @transform_15(%arg0: i32) -> (i32, i32) {
    %c0_i32 = arith.constant 0 : i32
    %c0_i32_0 = arith.constant 0 : i32
    %c0_i32_1 = arith.constant 0 : i32
    return %c0_i32, %c0_i32_0 : i32, i32
  }
  func.func @transform_16(%arg0: i32) -> (i32, i32) {
    %c0_i32 = arith.constant 0 : i32
    %c0_i32_0 = arith.constant 0 : i32
    %c0_i32_1 = arith.constant 0 : i32
    return %c0_i32, %c0_i32_0 : i32, i32
  }
  func.func @transform_17(%arg0: i32) -> (i32, i32) {
    %c0_i32 = arith.constant 0 : i32
    %c0_i32_0 = arith.constant 0 : i32
    %c0_i32_1 = arith.constant 0 : i32
    return %c0_i32, %c0_i32_0 : i32, i32
  }
  func.func @transform_18(%arg0: i32) -> (i32, i32, i32) {
    %c0_i32 = arith.constant 0 : i32
    %c0_i32_0 = arith.constant 0 : i32
    %c0_i32_1 = arith.constant 0 : i32
    return %arg0, %c0_i32, %c0_i32_0 : i32, i32, i32
  }
}

</mosaic_0001>

<llo_original>
// kernel: tpu_custom_call.1
$region0: #{tpu_custom_call.1}
  #allocation0 [shape = 'u32[]', space=smem, size = 0x4, offset = 0x4, fixed_abs, tag = 'smem constant byte address 0x4 - core index']
  #allocation1 [shape = 'u32[144,128]{1,0:T(1,128)}', space=vmem, size = 0x12000, scoped, tag = 'internal scratch']
  #allocation2 [shape = 'f32[16,32]{1,0:T(8,128)}', space=vmem, size = 0x2000, scoped, tag = 'scratch operand']
  #allocation3 [shape = 'f32[16,32]{1,0:T(8,128)}', space=vmem, size = 0x2000, scoped, tag = 'scratch operand']
  #allocation4 [shape = 'f32[1]{0:T(128)S(6)}', space=smem, size = 0x200, scoped, tag = 'scoped memory for tpu_custom_call.1']
  %s0 = inlined_call_operand.hbm [shape: f32[2,8,32], index: 0, kind: input, shape index: {}]
  %s1 = inlined_call_operand.vmem [shape: f32[32,32], index: 1, kind: input, shape index: {}]
  %s2 = inlined_call_operand.hbm [shape: f32[1,32], index: 2, kind: input, shape index: {}]
  %s3 = inlined_call_operand.vmem [shape: f32[32,32], index: 3, kind: input, shape index: {}]
  %s4 = inlined_call_operand.hbm [shape: f32[1,32], index: 4, kind: input, shape index: {}]
  %s5 = inlined_call_operand.vmem [shape: f32[32,32], index: 5, kind: input, shape index: {}]
  %s6 = inlined_call_operand.hbm [shape: f32[1,32], index: 6, kind: input, shape index: {}]
  %s7 = inlined_call_operand.vmem [shape: f32[8,32], index: 7, kind: input, shape index: {}]
  %s8 = inlined_call_operand.vmem [shape: f32[32,32], index: 8, kind: input, shape index: {}]
  %s9 = inlined_call_operand.<no memory space> [shape: f32[1], index: 9, kind: input, shape index: {}]
  %s10 = inlined_call_operand.vmem [shape: f32[32,32], index: 10, kind: input, shape index: {}]
  %s11 = inlined_call_operand.vmem [shape: f32[8,8], index: 11, kind: input, shape index: {}]
  %s12 = inlined_call_operand.vmem [shape: f32[32,256], index: 12, kind: input, shape index: {}]
  %s13 = inlined_call_operand.vmem [shape: f32[32,256], index: 13, kind: input, shape index: {}]
  %s14 = inlined_call_operand.vmem [shape: f32[1,256], index: 14, kind: input, shape index: {}]
  %s15 = inlined_call_operand.vmem [shape: f32[256,32], index: 15, kind: input, shape index: {}]
  %s16 = inlined_call_operand.vmem [shape: f32[32,32], index: 16, kind: input, shape index: {}]
  %s17 = inlined_call_operand.vmem [shape: f32[1,32], index: 17, kind: input, shape index: {}]
  %s18 = inlined_call_operand.hbm [shape: f32[2,8,32], index: 18, kind: output, shape index: {}]
  %s19 = sld [smem:[#allocation0]]
  $region121: #{tpu_custom_call.1} parent=0
    _
  %s21 = ssub.s32 1, %s19
  %s22 = scalar_select 0, %s21, %s19
  %23 = sst [smem:[#allocation4]] %s9
  $region1: #{tpu_custom_call.1} parent=0
    #allocation5 [shape = 'u8[8192]{0}', space=vmem, size = 0x2000, scoped, tag = 'input window, operand 0']
    #allocation6 [shape = 's32[2]{0}', space=sflag, size = 0x8, scoped, tag = 'scoped memory for tpu_custom_call.1']
    #allocation7 [shape = 's32[2]{0}', space=sflag, size = 0x8, scoped, tag = 'scoped memory for tpu_custom_call.1']
    #allocation8 [shape = 'u8[512]{0}', space=vmem, size = 0x400, scoped, tag = 'input window, operand 2, single buffered']
    #allocation9 [shape = 's32[1]{0}', space=sflag, size = 0x4, scoped, tag = 'scoped memory for tpu_custom_call.1']
    #allocation10 [shape = 'u8[512]{0}', space=vmem, size = 0x400, scoped, tag = 'input window, operand 4, single buffered']
    #allocation11 [shape = 'u8[512]{0}', space=vmem, size = 0x400, scoped, tag = 'input window, operand 6, single buffered']
    #allocation12 [shape = 's32[1]{0}', space=sflag, size = 0x4, scoped, tag = 'scoped memory for tpu_custom_call.1']
    #allocation13 [shape = 'u8[8192]{0}', space=vmem, size = 0x2000, scoped, tag = 'output window, operand 0']
    %24 = vsyncpa [#allocation6], 0
    %s25 = scalar_lea.sflag [#allocation6], 1
    %26 = vsyncpa %s25, 0
    %27 = vsyncpa [#allocation9], 0
    %28 = vsyncpa [#allocation12], 0
    %29 = vsyncpa [#allocation7], 0
    %s30 = scalar_lea.sflag [#allocation7], 1
    %31 = vsyncpa %s30, 0
    loop: start=0, step=1, limit=4
    $region2: #{tpu_custom_call.1} parent=1 // loop_pre_header
      _
    $region3: #{tpu_custom_call.1} parent=1 // loop_header
      %s33 = sphi 0, %s37
      %p34 = scmp.ge.s32.totalorder %s33, 4
      %s43 = sphi 0, %s45
      %s46 = sphi 0, %s43
      %s47 = sphi 0, %s46
      %s63 = sphi 0, %s47
      %s67 = sphi 0, %s67
      %s69 = sphi 0, %s67
      %s70 = sphi 0, %s69
      %s84 = sphi 0, %s70
      %s88 = sphi 0, %s88
      %s90 = sphi 0, %s88
      %s91 = sphi 0, %s90
      %s105 = sphi 0, %s91
      %s109 = sphi 0, %s109
      %s111 = sphi 0, %s109
      %s112 = sphi 0, %s111
      %s126 = sphi 0, %s112
      %s130 = sphi 0, %s130
      %s132 = sphi 0, %s130
      %s133 = sphi 0, %s132
      %s147 = sphi 0, %s133
      %s151 = sphi 0, %s151
      %s153 = sphi 0, %s151
      %s154 = sphi 0, %s153
      %s168 = sphi 0, %s154
      %s172 = sphi 0, %s172
      %s174 = sphi 0, %s172
      %s175 = sphi 0, %s174
      %s189 = sphi 0, %s175
      %s193 = sphi 0, %s193
      %s195 = sphi 0, %s193
      %s196 = sphi 0, %s195
      %s210 = sphi 0, %s196
      %s214 = sphi 0, %s214
      %s216 = sphi 0, %s214
      %s217 = sphi 0, %s216
      %s231 = sphi 0, %s217
      %s235 = sphi 0, %s235
      %s237 = sphi 0, %s235
      %s238 = sphi 0, %s237
      %s252 = sphi 0, %s238
      %s256 = sphi 0, %s256
      %s258 = sphi 0, %s256
      %s259 = sphi 0, %s258
      %s273 = sphi 0, %s259
      %s277 = sphi 0, %s277
      %s279 = sphi 0, %s277
      %s280 = sphi 0, %s279
      %s294 = sphi 0, %s280
      %s298 = sphi 0, %s298
      %s300 = sphi 0, %s298
      %s301 = sphi 0, %s300
      %s315 = sphi 0, %s301
      %s319 = sphi 0, %s319
      %s321 = sphi 0, %s319
      %s322 = sphi 0, %s321
      %s336 = sphi 0, %s322
      %s340 = sphi 0, %s340
      %s342 = sphi 0, %s340
      %s343 = sphi 0, %s342
      %s357 = sphi 0, %s343
      %s361 = sphi 0, %s361
      %s363 = sphi 0, %s361
      %s364 = sphi 0, %s363
      %s378 = sphi 0, %s364
      %s382 = sphi 0, %s382
      %s384 = sphi 0, %s382
      %s385 = sphi 0, %s384
      %s399 = sphi 0, %s385
      %s403 = sphi 0, %s403
      %s405 = sphi 0, %s403
      %s406 = sphi 0, %s405
      %s420 = sphi 0, %s406
      %s426 = sphi 0, %s428
      %s429 = sphi 0, %s426
      %s430 = sphi 0, %s429
      %s446 = sphi 0, %s430
    $region4: #{tpu_custom_call.1} parent=1 // loop_header_branch
      %36 = sbr.rel (%p34) target = $region8
    $region5: #{tpu_custom_call.1} parent=1 // loop_body
      %s38 = ssub.s32 %s33, 1
      %s39 = ssub.s32 %s33, 2
      %s40 = sadd.s32 %s33, 1
      %s41 = ssub.s32 %s33, %s40
      %p42 = scmp.eq.s32.totalorder %s41, 0
      %s44 = sadd.s32 %s43, 1
      %s45 = scalar_select %p42, %s43, %s44
      %p48 = pneg %p42
      %p49 = scmp.eq.s32.totalorder %s33, 1
      %p50 = por %p48, %p49
      %p51 = scmp.ne.s32.totalorder %s43, %s46
      %p52 = scmp.eq.s32.totalorder %s33, 0
      %p53 = por %p51, %p52
      %p54 = scmp.ne.s32.totalorder %s43, %s46
      %p55 = scmp.eq.s32.totalorder %s38, 1
      %p56 = por %p54, %p55
      %p57 = scmp.ne.s32.totalorder %s46, %s47
      %p58 = scmp.eq.s32.totalorder %s38, 0
      %p59 = por %p57, %p58
      %p60 = scmp.ne.s32.totalorder %s46, %s47
      %p61 = scmp.eq.s32.totalorder %s39, 1
      %p62 = por %p60, %p61
      %p64 = scmp.ne.s32.totalorder %s47, %s63
      %p65 = scmp.eq.s32.totalorder %s39, 0
      %p66 = por %p64, %p65
      %s68 = sadd.s32 %s67, 1
      %p71 = scmp.eq.s32.totalorder %s33, 1
      %p72 = scmp.ne.s32.totalorder %s67, %s69
      %p73 = scmp.eq.s32.totalorder %s33, 0
      %p74 = por %p72, %p73
      %p75 = scmp.ne.s32.totalorder %s67, %s69
      %p76 = scmp.eq.s32.totalorder %s38, 1
      %p77 = por %p75, %p76
      %p78 = scmp.ne.s32.totalorder %s69, %s70
      %p79 = scmp.eq.s32.totalorder %s38, 0
      %p80 = por %p78, %p79
      %p81 = scmp.ne.s32.totalorder %s69, %s70
      %p82 = scmp.eq.s32.totalorder %s39, 1
      %p83 = por %p81, %p82
      %p85 = scmp.ne.s32.totalorder %s70, %s84
      %p86 = scmp.eq.s32.totalorder %s39, 0
      %p87 = por %p85, %p86
      %s89 = sadd.s32 %s88, 1
      %p92 = scmp.eq.s32.totalorder %s33, 1
      %p93 = scmp.ne.s32.totalorder %s88, %s90
      %p94 = scmp.eq.s32.totalorder %s33, 0
      %p95 = por %p93, %p94
      %p96 = scmp.ne.s32.totalorder %s88, %s90
      %p97 = scmp.eq.s32.totalorder %s38, 1
      %p98 = por %p96, %p97
      %p99 = scmp.ne.s32.totalorder %s90, %s91
      %p100 = scmp.eq.s32.totalorder %s38, 0
      %p101 = por %p99, %p100
      %p102 = scmp.ne.s32.totalorder %s90, %s91
      %p103 = scmp.eq.s32.totalorder %s39, 1
      %p104 = por %p102, %p103
      %p106 = scmp.ne.s32.totalorder %s91, %s105
      %p107 = scmp.eq.s32.totalorder %s39, 0
      %p108 = por %p106, %p107
      %s110 = sadd.s32 %s109, 1
      %p113 = scmp.eq.s32.totalorder %s33, 1
      %p114 = scmp.ne.s32.totalorder %s109, %s111
      %p115 = scmp.eq.s32.totalorder %s33, 0
      %p116 = por %p114, %p115
      %p117 = scmp.ne.s32.totalorder %s109, %s111
      %p118 = scmp.eq.s32.totalorder %s38, 1
      %p119 = por %p117, %p118
      %p120 = scmp.ne.s32.totalorder %s111, %s112
      %p121 = scmp.eq.s32.totalorder %s38, 0
      %p122 = por %p120, %p121
      %p123 = scmp.ne.s32.totalorder %s111, %s112
      %p124 = scmp.eq.s32.totalorder %s39, 1
      %p125 = por %p123, %p124
      %p127 = scmp.ne.s32.totalorder %s112, %s126
      %p128 = scmp.eq.s32.totalorder %s39, 0
      %p129 = por %p127, %p128
      %s131 = sadd.s32 %s130, 1
      %p134 = scmp.eq.s32.totalorder %s33, 1
      %p135 = scmp.ne.s32.totalorder %s130, %s132
      %p136 = scmp.eq.s32.totalorder %s33, 0
      %p137 = por %p135, %p136
      %p138 = scmp.ne.s32.totalorder %s130, %s132
      %p139 = scmp.eq.s32.totalorder %s38, 1
      %p140 = por %p138, %p139
      %p141 = scmp.ne.s32.totalorder %s132, %s133
      %p142 = scmp.eq.s32.totalorder %s38, 0
      %p143 = por %p141, %p142
      %p144 = scmp.ne.s32.totalorder %s132, %s133
      %p145 = scmp.eq.s32.totalorder %s39, 1
      %p146 = por %p144, %p145
      %p148 = scmp.ne.s32.totalorder %s133, %s147
      %p149 = scmp.eq.s32.totalorder %s39, 0
      %p150 = por %p148, %p149
      %s152 = sadd.s32 %s151, 1
      %p155 = scmp.eq.s32.totalorder %s33, 1
      %p156 = scmp.ne.s32.totalorder %s151, %s153
      %p157 = scmp.eq.s32.totalorder %s33, 0
      %p158 = por %p156, %p157
      %p159 = scmp.ne.s32.totalorder %s151, %s153
      %p160 = scmp.eq.s32.totalorder %s38, 1
      %p161 = por %p159, %p160
      %p162 = scmp.ne.s32.totalorder %s153, %s154
      %p163 = scmp.eq.s32.totalorder %s38, 0
      %p164 = por %p162, %p163
      %p165 = scmp.ne.s32.totalorder %s153, %s154
      %p166 = scmp.eq.s32.totalorder %s39, 1
      %p167 = por %p165, %p166
      %p169 = scmp.ne.s32.totalorder %s154, %s168
      %p170 = scmp.eq.s32.totalorder %s39, 0
      %p171 = por %p169, %p170
      %s173 = sadd.s32 %s172, 1
      %p176 = scmp.eq.s32.totalorder %s33, 1
      %p177 = scmp.ne.s32.totalorder %s172, %s174
      %p178 = scmp.eq.s32.totalorder %s33, 0
      %p179 = por %p177, %p178
      %p180 = scmp.ne.s32.totalorder %s172, %s174
      %p181 = scmp.eq.s32.totalorder %s38, 1
      %p182 = por %p180, %p181
      %p183 = scmp.ne.s32.totalorder %s174, %s175
      %p184 = scmp.eq.s32.totalorder %s38, 0
      %p185 = por %p183, %p184
      %p186 = scmp.ne.s32.totalorder %s174, %s175
      %p187 = scmp.eq.s32.totalorder %s39, 1
      %p188 = por %p186, %p187
      %p190 = scmp.ne.s32.totalorder %s175, %s189
      %p191 = scmp.eq.s32.totalorder %s39, 0
      %p192 = por %p190, %p191
      %s194 = sadd.s32 %s193, 1
      %p197 = scmp.eq.s32.totalorder %s33, 1
      %p198 = scmp.ne.s32.totalorder %s193, %s195
      %p199 = scmp.eq.s32.totalorder %s33, 0
      %p200 = por %p198, %p199
      %p201 = scmp.ne.s32.totalorder %s193, %s195
      %p202 = scmp.eq.s32.totalorder %s38, 1
      %p203 = por %p201, %p202
      %p204 = scmp.ne.s32.totalorder %s195, %s196
      %p205 = scmp.eq.s32.totalorder %s38, 0
      %p206 = por %p204, %p205
      %p207 = scmp.ne.s32.totalorder %s195, %s196
      %p208 = scmp.eq.s32.totalorder %s39, 1
      %p209 = por %p207, %p208
      %p211 = scmp.ne.s32.totalorder %s196, %s210
      %p212 = scmp.eq.s32.totalorder %s39, 0
      %p213 = por %p211, %p212
      %s215 = sadd.s32 %s214, 1
      %p218 = scmp.eq.s32.totalorder %s33, 1
      %p219 = scmp.ne.s32.totalorder %s214, %s216
      %p220 = scmp.eq.s32.totalorder %s33, 0
      %p221 = por %p219, %p220
      %p222 = scmp.ne.s32.totalorder %s214, %s216
      %p223 = scmp.eq.s32.totalorder %s38, 1
      %p224 = por %p222, %p223
      %p225 = scmp.ne.s32.totalorder %s216, %s217
      %p226 = scmp.eq.s32.totalorder %s38, 0
      %p227 = por %p225, %p226
      %p228 = scmp.ne.s32.totalorder %s216, %s217
      %p229 = scmp.eq.s32.totalorder %s39, 1
      %p230 = por %p228, %p229
      %p232 = scmp.ne.s32.totalorder %s217, %s231
      %p233 = scmp.eq.s32.totalorder %s39, 0
      %p234 = por %p232, %p233
      %s236 = sadd.s32 %s235, 1
      %p239 = scmp.eq.s32.totalorder %s33, 1
      %p240 = scmp.ne.s32.totalorder %s235, %s237
      %p241 = scmp.eq.s32.totalorder %s33, 0
      %p242 = por %p240, %p241
      %p243 = scmp.ne.s32.totalorder %s235, %s237
      %p244 = scmp.eq.s32.totalorder %s38, 1
      %p245 = por %p243, %p244
      %p246 = scmp.ne.s32.totalorder %s237, %s238
      %p247 = scmp.eq.s32.totalorder %s38, 0
      %p248 = por %p246, %p247
      %p249 = scmp.ne.s32.totalorder %s237, %s238
      %p250 = scmp.eq.s32.totalorder %s39, 1
      %p251 = por %p249, %p250
      %p253 = scmp.ne.s32.totalorder %s238, %s252
      %p254 = scmp.eq.s32.totalorder %s39, 0
      %p255 = por %p253, %p254
      %s257 = sadd.s32 %s256, 1
      %p260 = scmp.eq.s32.totalorder %s33, 1
      %p261 = scmp.ne.s32.totalorder %s256, %s258
      %p262 = scmp.eq.s32.totalorder %s33, 0
      %p263 = por %p261, %p262
      %p264 = scmp.ne.s32.totalorder %s256, %s258
      %p265 = scmp.eq.s32.totalorder %s38, 1
      %p266 = por %p264, %p265
      %p267 = scmp.ne.s32.totalorder %s258, %s259
      %p268 = scmp.eq.s32.totalorder %s38, 0
      %p269 = por %p267, %p268
      %p270 = scmp.ne.s32.totalorder %s258, %s259
      %p271 = scmp.eq.s32.totalorder %s39, 1
      %p272 = por %p270, %p271
      %p274 = scmp.ne.s32.totalorder %s259, %s273
      %p275 = scmp.eq.s32.totalorder %s39, 0
      %p276 = por %p274, %p275
      %s278 = sadd.s32 %s277, 1
      %p281 = scmp.eq.s32.totalorder %s33, 1
      %p282 = scmp.ne.s32.totalorder %s277, %s279
      %p283 = scmp.eq.s32.totalorder %s33, 0
      %p284 = por %p282, %p283
      %p285 = scmp.ne.s32.totalorder %s277, %s279
      %p286 = scmp.eq.s32.totalorder %s38, 1
      %p287 = por %p285, %p286
      %p288 = scmp.ne.s32.totalorder %s279, %s280
      %p289 = scmp.eq.s32.totalorder %s38, 0
      %p290 = por %p288, %p289
      %p291 = scmp.ne.s32.totalorder %s279, %s280
      %p292 = scmp.eq.s32.totalorder %s39, 1
      %p293 = por %p291, %p292
      %p295 = scmp.ne.s32.totalorder %s280, %s294
      %p296 = scmp.eq.s32.totalorder %s39, 0
      %p297 = por %p295, %p296
      %s299 = sadd.s32 %s298, 1
      %p302 = scmp.eq.s32.totalorder %s33, 1
      %p303 = scmp.ne.s32.totalorder %s298, %s300
      %p304 = scmp.eq.s32.totalorder %s33, 0
      %p305 = por %p303, %p304
      %p306 = scmp.ne.s32.totalorder %s298, %s300
      %p307 = scmp.eq.s32.totalorder %s38, 1
      %p308 = por %p306, %p307
      %p309 = scmp.ne.s32.totalorder %s300, %s301
      %p310 = scmp.eq.s32.totalorder %s38, 0
      %p311 = por %p309, %p310
      %p312 = scmp.ne.s32.totalorder %s300, %s301
      %p313 = scmp.eq.s32.totalorder %s39, 1
      %p314 = por %p312, %p313
      %p316 = scmp.ne.s32.totalorder %s301, %s315
      %p317 = scmp.eq.s32.totalorder %s39, 0
      %p318 = por %p316, %p317
      %s320 = sadd.s32 %s319, 1
      %p323 = scmp.eq.s32.totalorder %s33, 1
      %p324 = scmp.ne.s32.totalorder %s319, %s321
      %p325 = scmp.eq.s32.totalorder %s33, 0
      %p326 = por %p324, %p325
      %p327 = scmp.ne.s32.totalorder %s319, %s321
      %p328 = scmp.eq.s32.totalorder %s38, 1
      %p329 = por %p327, %p328
      %p330 = scmp.ne.s32.totalorder %s321, %s322
      %p331 = scmp.eq.s32.totalorder %s38, 0
      %p332 = por %p330, %p331
      %p333 = scmp.ne.s32.totalorder %s321, %s322
      %p334 = scmp.eq.s32.totalorder %s39, 1
      %p335 = por %p333, %p334
      %p337 = scmp.ne.s32.totalorder %s322, %s336
      %p338 = scmp.eq.s32.totalorder %s39, 0
      %p339 = por %p337, %p338
      %s341 = sadd.s32 %s340, 1
      %p344 = scmp.eq.s32.totalorder %s33, 1
      %p345 = scmp.ne.s32.totalorder %s340, %s342
      %p346 = scmp.eq.s32.totalorder %s33, 0
      %p347 = por %p345, %p346
      %p348 = scmp.ne.s32.totalorder %s340, %s342
      %p349 = scmp.eq.s32.totalorder %s38, 1
      %p350 = por %p348, %p349
      %p351 = scmp.ne.s32.totalorder %s342, %s343
      %p352 = scmp.eq.s32.totalorder %s38, 0
      %p353 = por %p351, %p352
      %p354 = scmp.ne.s32.totalorder %s342, %s343
      %p355 = scmp.eq.s32.totalorder %s39, 1
      %p356 = por %p354, %p355
      %p358 = scmp.ne.s32.totalorder %s343, %s357
      %p359 = scmp.eq.s32.totalorder %s39, 0
      %p360 = por %p358, %p359
      %s362 = sadd.s32 %s361, 1
      %p365 = scmp.eq.s32.totalorder %s33, 1
      %p366 = scmp.ne.s32.totalorder %s361, %s363
      %p367 = scmp.eq.s32.totalorder %s33, 0
      %p368 = por %p366, %p367
      %p369 = scmp.ne.s32.totalorder %s361, %s363
      %p370 = scmp.eq.s32.totalorder %s38, 1
      %p371 = por %p369, %p370
      %p372 = scmp.ne.s32.totalorder %s363, %s364
      %p373 = scmp.eq.s32.totalorder %s38, 0
      %p374 = por %p372, %p373
      %p375 = scmp.ne.s32.totalorder %s363, %s364
      %p376 = scmp.eq.s32.totalorder %s39, 1
      %p377 = por %p375, %p376
      %p379 = scmp.ne.s32.totalorder %s364, %s378
      %p380 = scmp.eq.s32.totalorder %s39, 0
      %p381 = por %p379, %p380
      %s383 = sadd.s32 %s382, 1
      %p386 = scmp.eq.s32.totalorder %s33, 1
      %p387 = scmp.ne.s32.totalorder %s382, %s384
      %p388 = scmp.eq.s32.totalorder %s33, 0
      %p389 = por %p387, %p388
      %p390 = scmp.ne.s32.totalorder %s382, %s384
      %p391 = scmp.eq.s32.totalorder %s38, 1
      %p392 = por %p390, %p391
      %p393 = scmp.ne.s32.totalorder %s384, %s385
      %p394 = scmp.eq.s32.totalorder %s38, 0
      %p395 = por %p393, %p394
      %p396 = scmp.ne.s32.totalorder %s384, %s385
      %p397 = scmp.eq.s32.totalorder %s39, 1
      %p398 = por %p396, %p397
      %p400 = scmp.ne.s32.totalorder %s385, %s399
      %p401 = scmp.eq.s32.totalorder %s39, 0
      %p402 = por %p400, %p401
      %s404 = sadd.s32 %s403, 1
      %p407 = scmp.eq.s32.totalorder %s33, 1
      %p408 = scmp.ne.s32.totalorder %s403, %s405
      %p409 = scmp.eq.s32.totalorder %s33, 0
      %p410 = por %p408, %p409
      %p411 = scmp.ne.s32.totalorder %s403, %s405
      %p412 = scmp.eq.s32.totalorder %s38, 1
      %p413 = por %p411, %p412
      %p414 = scmp.ne.s32.totalorder %s405, %s406
      %p415 = scmp.eq.s32.totalorder %s38, 0
      %p416 = por %p414, %p415
      %p417 = scmp.ne.s32.totalorder %s405, %s406
      %p418 = scmp.eq.s32.totalorder %s39, 1
      %p419 = por %p417, %p418
      %p421 = scmp.ne.s32.totalorder %s406, %s420
      %p422 = scmp.eq.s32.totalorder %s39, 0
      %p423 = por %p421, %p422
      %s424 = ssub.s32 %s33, %s40
      %p425 = scmp.eq.s32.totalorder %s424, 0
      %s427 = sadd.s32 %s426, 1
      %s428 = scalar_select %p425, %s426, %s427
      %p431 = pneg %p425
      %p432 = scmp.eq.s32.totalorder %s33, 1
      %p433 = por %p431, %p432
      %p434 = scmp.ne.s32.totalorder %s426, %s429
      %p435 = scmp.eq.s32.totalorder %s33, 0
      %p436 = por %p434, %p435
      %p437 = scmp.ne.s32.totalorder %s426, %s429
      %p438 = scmp.eq.s32.totalorder %s38, 1
      %p439 = por %p437, %p438
      %p440 = scmp.ne.s32.totalorder %s429, %s430
      %p441 = scmp.eq.s32.totalorder %s38, 0
      %p442 = por %p440, %p441
      %p443 = scmp.ne.s32.totalorder %s429, %s430
      %p444 = scmp.eq.s32.totalorder %s39, 1
      %p445 = por %p443, %p444
      %p447 = scmp.ne.s32.totalorder %s430, %s446
      %p448 = scmp.eq.s32.totalorder %s39, 0
      %p449 = por %p447, %p448
      %p450 = scmp.le.s32.totalorder 1, %s33
      %p451 = scmp.lt.s32.totalorder %s33, 3
      %p452 = pnand %p450, %p451
      %p453 = pneg %p452
      // Predicated region
      $region9: #{tpu_custom_call.1} parent=5 // pred_check
        _
      $region10: #{tpu_custom_call.1} parent=5 // pred_check_branch
        %455 = sbr.rel (%p452) target = $region12
      $region11: #{tpu_custom_call.1} parent=5 // pred_region
        %s456 = ssub.s32 %s33, 1
        // Predicated region
        $region13: #{tpu_custom_call.1} parent=11 // pred_check
          %p457 = pneg %p80
        $region14: #{tpu_custom_call.1} parent=11 // pred_check_branch
          %459 = sbr.rel (%p457) target = $region16
        $region15: #{tpu_custom_call.1} parent=11 // pred_region
          _
        $region16: #{tpu_custom_call.1} parent=11 // pred_fallthru
          _
        // Predicated region
        $region17: #{tpu_custom_call.1} parent=11 // pred_check
          %p460 = pneg %p101
        $region18: #{tpu_custom_call.1} parent=11 // pred_check_branch
          %462 = sbr.rel (%p460) target = $region20
        $region19: #{tpu_custom_call.1} parent=11 // pred_region
          %s464 = ssub.s32 16, 16
          %465 = vsyncadd [#allocation9], %s464
          %s467 = sshll.u32 [#allocation8], 4
          %s468 = int_to_ptr.vmem [resolvable:$true] %s467
          %470 = dma.hbm_to_vmem [thread:$0]  %s2, 16, %s468, [#allocation9]
        $region20: #{tpu_custom_call.1} parent=11 // pred_fallthru
          _
        // Predicated region
        $region21: #{tpu_custom_call.1} parent=11 // pred_check
          %p471 = pneg %p122
        $region22: #{tpu_custom_call.1} parent=11 // pred_check_branch
          %473 = sbr.rel (%p471) target = $region24
        $region23: #{tpu_custom_call.1} parent=11 // pred_region
          _
        $region24: #{tpu_custom_call.1} parent=11 // pred_fallthru
          _
        // Predicated region
        $region25: #{tpu_custom_call.1} parent=11 // pred_check
          %p474 = pneg %p143
        $region26: #{tpu_custom_call.1} parent=11 // pred_check_branch
          %476 = sbr.rel (%p474) target = $region28
        $region27: #{tpu_custom_call.1} parent=11 // pred_region
          %s478 = ssub.s32 16, 16
          %479 = vsyncadd [#allocation9], %s478
          %s481 = sshll.u32 [#allocation10], 4
          %s482 = int_to_ptr.vmem [resolvable:$true] %s481
          %484 = dma.hbm_to_vmem [thread:$0]  %s4, 16, %s482, [#allocation9]
        $region28: #{tpu_custom_call.1} parent=11 // pred_fallthru
          _
        // Predicated region
        $region29: #{tpu_custom_call.1} parent=11 // pred_check
          %p485 = pneg %p164
        $region30: #{tpu_custom_call.1} parent=11 // pred_check_branch
          %487 = sbr.rel (%p485) target = $region32
        $region31: #{tpu_custom_call.1} parent=11 // pred_region
          _
        $region32: #{tpu_custom_call.1} parent=11 // pred_fallthru
          _
        // Predicated region
        $region33: #{tpu_custom_call.1} parent=11 // pred_check
          %p488 = pneg %p185
        $region34: #{tpu_custom_call.1} parent=11 // pred_check_branch
          %490 = sbr.rel (%p488) target = $region36
        $region35: #{tpu_custom_call.1} parent=11 // pred_region
          %s492 = ssub.s32 16, 16
          %493 = vsyncadd [#allocation12], %s492
          %s495 = sshll.u32 [#allocation11], 4
          %s496 = int_to_ptr.vmem [resolvable:$true] %s495
          %498 = dma.hbm_to_vmem [thread:$0]  %s6, 16, %s496, [#allocation12]
        $region36: #{tpu_custom_call.1} parent=11 // pred_fallthru
          _
        // Predicated region
        $region37: #{tpu_custom_call.1} parent=11 // pred_check
          %p499 = pneg %p206
        $region38: #{tpu_custom_call.1} parent=11 // pred_check_branch
          %501 = sbr.rel (%p499) target = $region40
        $region39: #{tpu_custom_call.1} parent=11 // pred_region
          _
        $region40: #{tpu_custom_call.1} parent=11 // pred_fallthru
          _
        // Predicated region
        $region41: #{tpu_custom_call.1} parent=11 // pred_check
          %p502 = pneg %p227
        $region42: #{tpu_custom_call.1} parent=11 // pred_check_branch
          %504 = sbr.rel (%p502) target = $region44
        $region43: #{tpu_custom_call.1} parent=11 // pred_region
          _
        $region44: #{tpu_custom_call.1} parent=11 // pred_fallthru
          _
        // Predicated region
        $region45: #{tpu_custom_call.1} parent=11 // pred_check
          %p505 = pneg %p248
        $region46: #{tpu_custom_call.1} parent=11 // pred_check_branch
          %507 = sbr.rel (%p505) target = $region48
        $region47: #{tpu_custom_call.1} parent=11 // pred_region
          _
        $region48: #{tpu_custom_call.1} parent=11 // pred_fallthru
          _
        // Predicated region
        $region49: #{tpu_custom_call.1} parent=11 // pred_check
          %p508 = pneg %p269
        $region50: #{tpu_custom_call.1} parent=11 // pred_check_branch
          %510 = sbr.rel (%p508) target = $region52
        $region51: #{tpu_custom_call.1} parent=11 // pred_region
          _
        $region52: #{tpu_custom_call.1} parent=11 // pred_fallthru
          _
        // Predicated region
        $region53: #{tpu_custom_call.1} parent=11 // pred_check
          %p511 = pneg %p290
        $region54: #{tpu_custom_call.1} parent=11 // pred_check_branch
          %513 = sbr.rel (%p511) target = $region56
        $region55: #{tpu_custom_call.1} parent=11 // pred_region
          _
        $region56: #{tpu_custom_call.1} parent=11 // pred_fallthru
          _
        // Predicated region
        $region57: #{tpu_custom_call.1} parent=11 // pred_check
          %p514 = pneg %p311
        $region58: #{tpu_custom_call.1} parent=11 // pred_check_branch
          %516 = sbr.rel (%p514) target = $region60
        $region59: #{tpu_custom_call.1} parent=11 // pred_region
          _
        $region60: #{tpu_custom_call.1} parent=11 // pred_fallthru
          _
        // Predicated region
        $region61: #{tpu_custom_call.1} parent=11 // pred_check
          %p517 = pneg %p332
        $region62: #{tpu_custom_call.1} parent=11 // pred_check_branch
          %519 = sbr.rel (%p517) target = $region64
        $region63: #{tpu_custom_call.1} parent=11 // pred_region
          _
        $region64: #{tpu_custom_call.1} parent=11 // pred_fallthru
          _
        // Predicated region
        $region65: #{tpu_custom_call.1} parent=11 // pred_check
          %p520 = pneg %p353
        $region66: #{tpu_custom_call.1} parent=11 // pred_check_branch
          %522 = sbr.rel (%p520) target = $region68
        $region67: #{tpu_custom_call.1} parent=11 // pred_region
          _
        $region68: #{tpu_custom_call.1} parent=11 // pred_fallthru
          _
        // Predicated region
        $region69: #{tpu_custom_call.1} parent=11 // pred_check
          %p523 = pneg %p374
        $region70: #{tpu_custom_call.1} parent=11 // pred_check_branch
          %525 = sbr.rel (%p523) target = $region72
        $region71: #{tpu_custom_call.1} parent=11 // pred_region
          _
        $region72: #{tpu_custom_call.1} parent=11 // pred_fallthru
          _
        // Predicated region
        $region73: #{tpu_custom_call.1} parent=11 // pred_check
          %p526 = pneg %p395
        $region74: #{tpu_custom_call.1} parent=11 // pred_check_branch
          %528 = sbr.rel (%p526) target = $region76
        $region75: #{tpu_custom_call.1} parent=11 // pred_region
          _
        $region76: #{tpu_custom_call.1} parent=11 // pred_fallthru
          _
        // Predicated region
        $region77: #{tpu_custom_call.1} parent=11 // pred_check
          %p529 = pneg %p416
        $region78: #{tpu_custom_call.1} parent=11 // pred_check_branch
          %531 = sbr.rel (%p529) target = $region80
        $region79: #{tpu_custom_call.1} parent=11 // pred_region
          _
        $region80: #{tpu_custom_call.1} parent=11 // pred_fallthru
          _
      $region12: #{tpu_custom_call.1} parent=5 // pred_fallthru
        _
      %p532 = scmp.lt.s32.totalorder %s33, 2
      // Predicated region
      $region81: #{tpu_custom_call.1} parent=5 // pred_check
        %p533 = pneg %p532
      $region82: #{tpu_custom_call.1} parent=5 // pred_check_branch
        %535 = sbr.rel (%p533) target = $region84
      $region83: #{tpu_custom_call.1} parent=5 // pred_region
        // Predicated region
        $region85: #{tpu_custom_call.1} parent=83 // pred_check
          %p536 = pneg %p53
        $region86: #{tpu_custom_call.1} parent=83 // pred_check_branch
          %538 = sbr.rel (%p536) target = $region88
        $region87: #{tpu_custom_call.1} parent=83 // pred_region
          %s539 = sand.u32 %s43, 1
          %s540 = scalar_lea.sflag [#allocation6], %s539
          %s541 = sand.u32 %s43, 1
          %s542 = smul.addr %s541, 8
          %s543 = scalar_lea.vmem [#allocation5], %s542
          %s545 = ssub.s32 128, 128
          %546 = vsyncadd %s540, %s545
          %s547 = smul.addr %s33, 128
          %s548 = scalar_lea.hbm %s0, %s547
          %s550 = sshll.u32 %s543, 4
          %s551 = int_to_ptr.vmem [resolvable:$true] %s550
          %553 = dma.hbm_to_vmem [thread:$0]  %s548, 128, %s551, %s540
        $region88: #{tpu_custom_call.1} parent=83 // pred_fallthru
          _
      $region84: #{tpu_custom_call.1} parent=5 // pred_fallthru
        _
      %p554 = scmp.le.s32.totalorder 1, %s33
      %p555 = scmp.lt.s32.totalorder %s33, 3
      %p556 = pnand %p554, %p555
      %p557 = pneg %p556
      // Predicated region
      $region89: #{tpu_custom_call.1} parent=5 // pred_check
        _
      $region90: #{tpu_custom_call.1} parent=5 // pred_check_branch
        %559 = sbr.rel (%p556) target = $region92
      $region91: #{tpu_custom_call.1} parent=5 // pred_region
        %s560 = ssub.s32 %s33, 1
        %s561 = sand.u32 %s46, 1
        %s562 = scalar_lea.sflag [#allocation6], %s561
        %s563 = sand.u32 %s46, 1
        %s564 = smul.addr %s563, 8
        %s565 = scalar_lea.vmem [#allocation5], %s564
        // Predicated region
        $region93: #{tpu_custom_call.1} parent=91 // pred_check
          %p566 = pneg %p59
        $region94: #{tpu_custom_call.1} parent=91 // pred_check_branch
          %568 = sbr.rel (%p566) target = $region96
        $region95: #{tpu_custom_call.1} parent=91 // pred_region
          %569 = dma.done %s562, 128
        $region96: #{tpu_custom_call.1} parent=91 // pred_fallthru
          _
        // Predicated region
        $region97: #{tpu_custom_call.1} parent=91 // pred_check
          %p570 = pneg %p101
        $region98: #{tpu_custom_call.1} parent=91 // pred_check_branch
          %572 = sbr.rel (%p570) target = $region100
        $region99: #{tpu_custom_call.1} parent=91 // pred_region
          %573 = dma.done [#allocation9], 16
        $region100: #{tpu_custom_call.1} parent=91 // pred_fallthru
          _
        // Predicated region
        $region101: #{tpu_custom_call.1} parent=91 // pred_check
          %p574 = pneg %p143
        $region102: #{tpu_custom_call.1} parent=91 // pred_check_branch
          %576 = sbr.rel (%p574) target = $region104
        $region103: #{tpu_custom_call.1} parent=91 // pred_region
          %577 = dma.done [#allocation9], 16
        $region104: #{tpu_custom_call.1} parent=91 // pred_fallthru
          _
        // Predicated region
        $region105: #{tpu_custom_call.1} parent=91 // pred_check
          %p578 = pneg %p185
        $region106: #{tpu_custom_call.1} parent=91 // pred_check_branch
          %580 = sbr.rel (%p578) target = $region108
        $region107: #{tpu_custom_call.1} parent=91 // pred_region
          %581 = dma.done [#allocation12], 16
        $region108: #{tpu_custom_call.1} parent=91 // pred_fallthru
          _
        %s582 = sand.u32 %s46, 1
        %s583 = scalar_lea.sflag [#allocation6], %s582
        %s584 = sand.u32 %s46, 1
        %s585 = smul.addr %s584, 8
        %s586 = scalar_lea.vmem [#allocation5], %s585
        %p587 = pneg %p59
        %p588 = pneg %p56
        %p589 = pneg %p80
        %p590 = pneg %p77
        %p591 = pneg %p101
        %p592 = pneg %p98
        %p593 = pneg %p122
        %p594 = pneg %p119
        %p595 = pneg %p143
        %p596 = pneg %p140
        %p597 = pneg %p164
        %p598 = pneg %p161
        %p599 = pneg %p185
        %p600 = pneg %p182
        %p601 = pneg %p206
        %p602 = pneg %p203
        %p603 = pneg %p227
        %p604 = pneg %p224
        %p605 = pneg %p248
        %p606 = pneg %p245
        %p607 = pneg %p269
        %p608 = pneg %p266
        %p609 = pneg %p290
        %p610 = pneg %p287
        %p611 = pneg %p311
        %p612 = pneg %p308
        %p613 = pneg %p332
        %p614 = pneg %p329
        %p615 = pneg %p353
        %p616 = pneg %p350
        %p617 = pneg %p374
        %p618 = pneg %p371
        %p619 = pneg %p395
        %p620 = pneg %p392
        %p621 = pneg %p416
        %p622 = pneg %p413
        %p623 = pneg %p442
        %p624 = pneg %p439
        %s625 = sand.u32 %s429, 1
        %s626 = scalar_lea.sflag [#allocation7], %s625
        %s627 = sand.u32 %s429, 1
        %s628 = smul.addr %s627, 8
        %s629 = scalar_lea.vmem [#allocation13], %s628
        %v630 = vld [vmem:[%s565] sm:$0xff]
        %v631 = vld [vmem:[%s10] sm:$0xff]
        %v632 = vld [vmem:[%s10 + $0x8] sm:$0xff]
        %v633 = vld [vmem:[%s10 + $0x10] sm:$0xff]
        %v634 = vld [vmem:[%s10 + $0x18] sm:$0xff]
        %v635 = vld [vmem:[%s11] sm:$0xff]
        %v636 = vld [vmem:[%s1] sm:$0xff]
        %v637 = vld [vmem:[%s1 + $0x8] sm:$0xff]
        %v638 = vld [vmem:[%s1 + $0x10] sm:$0xff]
        %v639 = vld [vmem:[%s1 + $0x18] sm:$0xff]
        %v640 = vld [vmem:[#allocation8] sm:$0x1]
        %v642 = vlaneseq
        %v643 = vshrl.u32 %v642, 7
        %v644 = vsub.s32 0, %v643
        %v645 = vrot.slane %v640, %v644
        %vm647 = vcmask 261120
        %v649 = vsel %vm647, %v630, 0
        %651 = vmatprep.subr.mxu0 0.0
        %652 = vmatpush1.msra.mxu0 0.0
        %653 = vmatprep.subr.mxu0 0.0
        %654 = vmatpush1.msra.mxu0 0.0
        %655 = vmatprep.subr.mxu0 0.0
        %656 = vmatpush1.msra.mxu0 0.0
        %657 = vmatprep.subr.mxu0 0.0
        %658 = vmatpush1.msra.mxu0 0.0
        %659 = vmatprep.subr.mxu0 0.0
        %660 = vmatpush1.msra.mxu0 0.0
        %661 = vmatprep.subr.mxu0 0.0
        %662 = vmatpush1.msra.mxu0 0.0
        %663 = vmatprep.subr.mxu0 0.0
        %664 = vmatpush1.msra.mxu0 0.0
        %665 = vmatprep.subr.mxu0 0.0
        %666 = vmatpush1.msra.mxu0 0.0
        %667 = vmatprep.subr.mxu0 0.0
        %668 = vmatpush1.msra.mxu0 0.0
        %669 = vmatprep.subr.mxu0 0.0
        %670 = vmatpush1.msra.mxu0 0.0
        %671 = vmatprep.subr.mxu0 0.0
        %672 = vmatpush1.msra.mxu0 0.0
        %673 = vmatprep.subr.mxu0 0.0
        %674 = vmatpush1.msra.mxu0 0.0
        %675 = vmatprep.subr.mxu0 0.0
        %676 = vmatpush1.msra.mxu0 %v639
        %677 = vmatprep.subr.mxu0 0.0
        %678 = vmatpush1.msra.mxu0 %v638
        %679 = vmatprep.subr.mxu0 0.0
        %680 = vmatpush1.msra.mxu0 %v637
        %681 = vmatprep.subr.mxu0 0.0
        %682 = vmatpush1.msra.mxu0 %v636
        %683 = vmatprep.subr.mxu0 0.0
        %684 = vmatpush2.msra.mxu0 0.0
        %685 = vmatprep.subr.mxu0 0.0
        %686 = vmatpush2.msra.mxu0 0.0
        %687 = vmatprep.subr.mxu0 0.0
        %688 = vmatpush2.msra.mxu0 0.0
        %689 = vmatprep.subr.mxu0 0.0
        %690 = vmatpush2.msra.mxu0 0.0
        %691 = vmatprep.subr.mxu0 0.0
        %692 = vmatpush2.msra.mxu0 0.0
        %693 = vmatprep.subr.mxu0 0.0
        %694 = vmatpush2.msra.mxu0 0.0
        %695 = vmatprep.subr.mxu0 0.0
        %696 = vmatpush2.msra.mxu0 0.0
        %697 = vmatprep.subr.mxu0 0.0
        %698 = vmatpush2.msra.mxu0 0.0
        %699 = vmatprep.subr.mxu0 0.0
        %700 = vmatpush2.msra.mxu0 0.0
        %701 = vmatprep.subr.mxu0 0.0
        %702 = vmatpush2.msra.mxu0 0.0
        %703 = vmatprep.subr.mxu0 0.0
        %704 = vmatpush2.msra.mxu0 0.0
        %705 = vmatprep.subr.mxu0 0.0
        %706 = vmatpush2.msra.mxu0 0.0
        %707 = vmatprep.subr.mxu0 0.0
        %708 = vmatpush2.msra.mxu0 0.0
        %709 = vmatprep.subr.mxu0 0.0
        %710 = vmatpush2.msra.mxu0 0.0
        %711 = vmatprep.subr.mxu0 0.0
        %712 = vmatpush2.msra.mxu0 0.0
        %713 = vmatprep.subr.mxu0 0.0
        %714 = vmatpush2.msra.mxu0 0.0
        %715 = vmatprep.mubr.f32.mxu0 0.0
        %716 = vmatmul.mubr.f32.gmra.mxu0 %v649
        %v717 = vpop.f32.mrf.mxu0
        %v718 = vadd.f32 %v645, %v717
        %v719 = vpop.f32.mrf.mxu0
        %720 = vdwg.mxu0
        %v721 = vld [vmem:[%s3] sm:$0xff]
        %v722 = vld [vmem:[%s3 + $0x8] sm:$0xff]
        %v723 = vld [vmem:[%s3 + $0x10] sm:$0xff]
        %v724 = vld [vmem:[%s3 + $0x18] sm:$0xff]
        %v725 = vld [vmem:[#allocation10] sm:$0x1]
        %v727 = vlaneseq
        %v728 = vshrl.u32 %v727, 7
        %v729 = vsub.s32 0, %v728
        %v730 = vrot.slane %v725, %v729
        %732 = vmatprep.subr.mxu0 0.0
        %733 = vmatpush1.msra.mxu0 0.0
        %734 = vmatprep.subr.mxu0 0.0
        %735 = vmatpush1.msra.mxu0 0.0
        %736 = vmatprep.subr.mxu0 0.0
        %737 = vmatpush1.msra.mxu0 0.0
        %738 = vmatprep.subr.mxu0 0.0
        %739 = vmatpush1.msra.mxu0 0.0
        %740 = vmatprep.subr.mxu0 0.0
        %741 = vmatpush1.msra.mxu0 0.0
        %742 = vmatprep.subr.mxu0 0.0
        %743 = vmatpush1.msra.mxu0 0.0
        %744 = vmatprep.subr.mxu0 0.0
        %745 = vmatpush1.msra.mxu0 0.0
        %746 = vmatprep.subr.mxu0 0.0
        %747 = vmatpush1.msra.mxu0 0.0
        %748 = vmatprep.subr.mxu0 0.0
        %749 = vmatpush1.msra.mxu0 0.0
        %750 = vmatprep.subr.mxu0 0.0
        %751 = vmatpush1.msra.mxu0 0.0
        %752 = vmatprep.subr.mxu0 0.0
        %753 = vmatpush1.msra.mxu0 0.0
        %754 = vmatprep.subr.mxu0 0.0
        %755 = vmatpush1.msra.mxu0 0.0
        %756 = vmatprep.subr.mxu0 0.0
        %757 = vmatpush1.msra.mxu0 %v724
        %758 = vmatprep.subr.mxu0 0.0
        %759 = vmatpush1.msra.mxu0 %v723
        %760 = vmatprep.subr.mxu0 0.0
        %761 = vmatpush1.msra.mxu0 %v722
        %762 = vmatprep.subr.mxu0 0.0
        %763 = vmatpush1.msra.mxu0 %v721
        %764 = vmatprep.subr.mxu0 0.0
        %765 = vmatpush2.msra.mxu0 0.0
        %766 = vmatprep.subr.mxu0 0.0
        %767 = vmatpush2.msra.mxu0 0.0
        %768 = vmatprep.subr.mxu0 0.0
        %769 = vmatpush2.msra.mxu0 0.0
        %770 = vmatprep.subr.mxu0 0.0
        %771 = vmatpush2.msra.mxu0 0.0
        %772 = vmatprep.subr.mxu0 0.0
        %773 = vmatpush2.msra.mxu0 0.0
        %774 = vmatprep.subr.mxu0 0.0
        %775 = vmatpush2.msra.mxu0 0.0
        %776 = vmatprep.subr.mxu0 0.0
        %777 = vmatpush2.msra.mxu0 0.0
        %778 = vmatprep.subr.mxu0 0.0
        %779 = vmatpush2.msra.mxu0 0.0
        %780 = vmatprep.subr.mxu0 0.0
        %781 = vmatpush2.msra.mxu0 0.0
        %782 = vmatprep.subr.mxu0 0.0
        %783 = vmatpush2.msra.mxu0 0.0
        %784 = vmatprep.subr.mxu0 0.0
        %785 = vmatpush2.msra.mxu0 0.0
        %786 = vmatprep.subr.mxu0 0.0
        %787 = vmatpush2.msra.mxu0 0.0
        %788 = vmatprep.subr.mxu0 0.0
        %789 = vmatpush2.msra.mxu0 0.0
        %790 = vmatprep.subr.mxu0 0.0
        %791 = vmatpush2.msra.mxu0 0.0
        %792 = vmatprep.subr.mxu0 0.0
        %793 = vmatpush2.msra.mxu0 0.0
        %794 = vmatprep.subr.mxu0 0.0
        %795 = vmatpush2.msra.mxu0 0.0
        %796 = vmatprep.mubr.f32.mxu0 0.0
        %797 = vmatmul.mubr.f32.gmra.mxu0 %v649
        %v798 = vpop.f32.mrf.mxu0
        %v799 = vadd.f32 %v730, %v798
        %v800 = vpop.f32.mrf.mxu0
        %801 = vdwg.mxu0
        %v802 = vld [vmem:[%s5] sm:$0xff]
        %v803 = vld [vmem:[%s5 + $0x8] sm:$0xff]
        %v804 = vld [vmem:[%s5 + $0x10] sm:$0xff]
        %v805 = vld [vmem:[%s5 + $0x18] sm:$0xff]
        %v806 = vld [vmem:[#allocation11] sm:$0x1]
        %v808 = vlaneseq
        %v809 = vshrl.u32 %v808, 7
        %v810 = vsub.s32 0, %v809
        %v811 = vrot.slane %v806, %v810
        %813 = vmatprep.subr.mxu0 0.0
        %814 = vmatpush1.msra.mxu0 0.0
        %815 = vmatprep.subr.mxu0 0.0
        %816 = vmatpush1.msra.mxu0 0.0
        %817 = vmatprep.subr.mxu0 0.0
        %818 = vmatpush1.msra.mxu0 0.0
        %819 = vmatprep.subr.mxu0 0.0
        %820 = vmatpush1.msra.mxu0 0.0
        %821 = vmatprep.subr.mxu0 0.0
        %822 = vmatpush1.msra.mxu0 0.0
        %823 = vmatprep.subr.mxu0 0.0
        %824 = vmatpush1.msra.mxu0 0.0
        %825 = vmatprep.subr.mxu0 0.0
        %826 = vmatpush1.msra.mxu0 0.0
        %827 = vmatprep.subr.mxu0 0.0
        %828 = vmatpush1.msra.mxu0 0.0
        %829 = vmatprep.subr.mxu0 0.0
        %830 = vmatpush1.msra.mxu0 0.0
        %831 = vmatprep.subr.mxu0 0.0
        %832 = vmatpush1.msra.mxu0 0.0
        %833 = vmatprep.subr.mxu0 0.0
        %834 = vmatpush1.msra.mxu0 0.0
        %835 = vmatprep.subr.mxu0 0.0
        %836 = vmatpush1.msra.mxu0 0.0
        %837 = vmatprep.subr.mxu0 0.0
        %838 = vmatpush1.msra.mxu0 %v805
        %839 = vmatprep.subr.mxu0 0.0
        %840 = vmatpush1.msra.mxu0 %v804
        %841 = vmatprep.subr.mxu0 0.0
        %842 = vmatpush1.msra.mxu0 %v803
        %843 = vmatprep.subr.mxu0 0.0
        %844 = vmatpush1.msra.mxu0 %v802
        %845 = vmatprep.subr.mxu0 0.0
        %846 = vmatpush2.msra.mxu0 0.0
        %847 = vmatprep.subr.mxu0 0.0
        %848 = vmatpush2.msra.mxu0 0.0
        %849 = vmatprep.subr.mxu0 0.0
        %850 = vmatpush2.msra.mxu0 0.0
        %851 = vmatprep.subr.mxu0 0.0
        %852 = vmatpush2.msra.mxu0 0.0
        %853 = vmatprep.subr.mxu0 0.0
        %854 = vmatpush2.msra.mxu0 0.0
        %855 = vmatprep.subr.mxu0 0.0
        %856 = vmatpush2.msra.mxu0 0.0
        %857 = vmatprep.subr.mxu0 0.0
        %858 = vmatpush2.msra.mxu0 0.0
        %859 = vmatprep.subr.mxu0 0.0
        %860 = vmatpush2.msra.mxu0 0.0
        %861 = vmatprep.subr.mxu0 0.0
        %862 = vmatpush2.msra.mxu0 0.0
        %863 = vmatprep.subr.mxu0 0.0
        %864 = vmatpush2.msra.mxu0 0.0
        %865 = vmatprep.subr.mxu0 0.0
        %866 = vmatpush2.msra.mxu0 0.0
        %867 = vmatprep.subr.mxu0 0.0
        %868 = vmatpush2.msra.mxu0 0.0
        %869 = vmatprep.subr.mxu0 0.0
        %870 = vmatpush2.msra.mxu0 0.0
        %871 = vmatprep.subr.mxu0 0.0
        %872 = vmatpush2.msra.mxu0 0.0
        %873 = vmatprep.subr.mxu0 0.0
        %874 = vmatpush2.msra.mxu0 0.0
        %875 = vmatprep.subr.mxu0 0.0
        %876 = vmatpush2.msra.mxu0 0.0
        %877 = vmatprep.mubr.f32.mxu0 0.0
        %878 = vmatmul.mubr.f32.gmra.mxu0 %v649
        %v879 = vpop.f32.mrf.mxu0
        %v880 = vadd.f32 %v811, %v879
        %v881 = vpop.f32.mrf.mxu0
        %882 = vdwg.mxu0
        %v883 = vmul.f32 %v799, %v799
        %v885 = vsel %vm647, %v883, 0
        %887 = vmatprep.subr.mxu0 0.0
        %888 = vmatpush1.msra.mxu0 0.0
        %889 = vmatprep.subr.mxu0 0.0
        %890 = vmatpush1.msra.mxu0 0.0
        %891 = vmatprep.subr.mxu0 0.0
        %892 = vmatpush1.msra.mxu0 0.0
        %893 = vmatprep.subr.mxu0 0.0
        %894 = vmatpush1.msra.mxu0 0.0
        %895 = vmatprep.subr.mxu0 0.0
        %896 = vmatpush1.msra.mxu0 0.0
        %897 = vmatprep.subr.mxu0 0.0
        %898 = vmatpush1.msra.mxu0 0.0
        %899 = vmatprep.subr.mxu0 0.0
        %900 = vmatpush1.msra.mxu0 0.0
        %901 = vmatprep.subr.mxu0 0.0
        %902 = vmatpush1.msra.mxu0 0.0
        %903 = vmatprep.subr.mxu0 0.0
        %904 = vmatpush1.msra.mxu0 0.0
        %905 = vmatprep.subr.mxu0 0.0
        %906 = vmatpush1.msra.mxu0 0.0
        %907 = vmatprep.subr.mxu0 0.0
        %908 = vmatpush1.msra.mxu0 0.0
        %909 = vmatprep.subr.mxu0 0.0
        %910 = vmatpush1.msra.mxu0 0.0
        %911 = vmatprep.subr.mxu0 0.0
        %912 = vmatpush1.msra.mxu0 %v634
        %913 = vmatprep.subr.mxu0 0.0
        %914 = vmatpush1.msra.mxu0 %v633
        %915 = vmatprep.subr.mxu0 0.0
        %916 = vmatpush1.msra.mxu0 %v632
        %917 = vmatprep.subr.mxu0 0.0
        %918 = vmatpush1.msra.mxu0 %v631
        %919 = vmatprep.subr.mxu0 0.0
        %920 = vmatpush2.msra.mxu0 0.0
        %921 = vmatprep.subr.mxu0 0.0
        %922 = vmatpush2.msra.mxu0 0.0
        %923 = vmatprep.subr.mxu0 0.0
        %924 = vmatpush2.msra.mxu0 0.0
        %925 = vmatprep.subr.mxu0 0.0
        %926 = vmatpush2.msra.mxu0 0.0
        %927 = vmatprep.subr.mxu0 0.0
        %928 = vmatpush2.msra.mxu0 0.0
        %929 = vmatprep.subr.mxu0 0.0
        %930 = vmatpush2.msra.mxu0 0.0
        %931 = vmatprep.subr.mxu0 0.0
        %932 = vmatpush2.msra.mxu0 0.0
        %933 = vmatprep.subr.mxu0 0.0
        %934 = vmatpush2.msra.mxu0 0.0
        %935 = vmatprep.subr.mxu0 0.0
        %936 = vmatpush2.msra.mxu0 0.0
        %937 = vmatprep.subr.mxu0 0.0
        %938 = vmatpush2.msra.mxu0 0.0
        %939 = vmatprep.subr.mxu0 0.0
        %940 = vmatpush2.msra.mxu0 0.0
        %941 = vmatprep.subr.mxu0 0.0
        %942 = vmatpush2.msra.mxu0 0.0
        %943 = vmatprep.subr.mxu0 0.0
        %944 = vmatpush2.msra.mxu0 0.0
        %945 = vmatprep.subr.mxu0 0.0
        %946 = vmatpush2.msra.mxu0 0.0
        %947 = vmatprep.subr.mxu0 0.0
        %948 = vmatpush2.msra.mxu0 0.0
        %949 = vmatprep.subr.mxu0 0.0
        %950 = vmatpush2.msra.mxu0 0.0
        %951 = vmatprep.mubr.f32.mxu0 0.0
        %952 = vmatmul.mubr.f32.gmra.mxu0 %v885
        %v953 = vpop.f32.mrf.mxu0
        %v954 = vadd.f32 0.0, %v953
        %v955 = vpop.f32.mrf.mxu0
        %956 = vdwg.mxu0
        %v957 = vrsqrt.pop %v954
        %v958 = vmul.f32 %v954, %v957
        %vm959 = vcmp.eq.f32.partialorder %v954, inf
        %v960 = vsel %vm959, %v954, %v958
        %vm961 = vcmp.eq.f32.partialorder %v954, 0.0
        %v962 = vand.u32 %v954, 2147483648
        %v963 = vsel %vm961, %v962, %v960
        %v964 = vmax.f32 %v963, 1e-05
        %v965 = vrcp.pop %v964
        %v966 = vmul.f32 %v799, %v965
        %v967 = vmul.f32 %v880, %v880
        %v969 = vsel %vm647, %v967, 0
        %971 = vmatprep.subr.mxu0 0.0
        %972 = vmatpush1.msra.mxu0 0.0
        %973 = vmatprep.subr.mxu0 0.0
        %974 = vmatpush1.msra.mxu0 0.0
        %975 = vmatprep.subr.mxu0 0.0
        %976 = vmatpush1.msra.mxu0 0.0
        %977 = vmatprep.subr.mxu0 0.0
        %978 = vmatpush1.msra.mxu0 0.0
        %979 = vmatprep.subr.mxu0 0.0
        %980 = vmatpush1.msra.mxu0 0.0
        %981 = vmatprep.subr.mxu0 0.0
        %982 = vmatpush1.msra.mxu0 0.0
        %983 = vmatprep.subr.mxu0 0.0
        %984 = vmatpush1.msra.mxu0 0.0
        %985 = vmatprep.subr.mxu0 0.0
        %986 = vmatpush1.msra.mxu0 0.0
        %987 = vmatprep.subr.mxu0 0.0
        %988 = vmatpush1.msra.mxu0 0.0
        %989 = vmatprep.subr.mxu0 0.0
        %990 = vmatpush1.msra.mxu0 0.0
        %991 = vmatprep.subr.mxu0 0.0
        %992 = vmatpush1.msra.mxu0 0.0
        %993 = vmatprep.subr.mxu0 0.0
        %994 = vmatpush1.msra.mxu0 0.0
        %995 = vmatprep.subr.mxu0 0.0
        %996 = vmatpush1.msra.mxu0 %v634
        %997 = vmatprep.subr.mxu0 0.0
        %998 = vmatpush1.msra.mxu0 %v633
        %999 = vmatprep.subr.mxu0 0.0
        %1000 = vmatpush1.msra.mxu0 %v632
        %1001 = vmatprep.subr.mxu0 0.0
        %1002 = vmatpush1.msra.mxu0 %v631
        %1003 = vmatprep.subr.mxu0 0.0
        %1004 = vmatpush2.msra.mxu0 0.0
        %1005 = vmatprep.subr.mxu0 0.0
        %1006 = vmatpush2.msra.mxu0 0.0
        %1007 = vmatprep.subr.mxu0 0.0
        %1008 = vmatpush2.msra.mxu0 0.0
        %1009 = vmatprep.subr.mxu0 0.0
        %1010 = vmatpush2.msra.mxu0 0.0
        %1011 = vmatprep.subr.mxu0 0.0
        %1012 = vmatpush2.msra.mxu0 0.0
        %1013 = vmatprep.subr.mxu0 0.0
        %1014 = vmatpush2.msra.mxu0 0.0
        %1015 = vmatprep.subr.mxu0 0.0
        %1016 = vmatpush2.msra.mxu0 0.0
        %1017 = vmatprep.subr.mxu0 0.0
        %1018 = vmatpush2.msra.mxu0 0.0
        %1019 = vmatprep.subr.mxu0 0.0
        %1020 = vmatpush2.msra.mxu0 0.0
        %1021 = vmatprep.subr.mxu0 0.0
        %1022 = vmatpush2.msra.mxu0 0.0
        %1023 = vmatprep.subr.mxu0 0.0
        %1024 = vmatpush2.msra.mxu0 0.0
        %1025 = vmatprep.subr.mxu0 0.0
        %1026 = vmatpush2.msra.mxu0 0.0
        %1027 = vmatprep.subr.mxu0 0.0
        %1028 = vmatpush2.msra.mxu0 0.0
        %1029 = vmatprep.subr.mxu0 0.0
        %1030 = vmatpush2.msra.mxu0 0.0
        %1031 = vmatprep.subr.mxu0 0.0
        %1032 = vmatpush2.msra.mxu0 0.0
        %1033 = vmatprep.subr.mxu0 0.0
        %1034 = vmatpush2.msra.mxu0 0.0
        %1035 = vmatprep.mubr.f32.mxu0 0.0
        %1036 = vmatmul.mubr.f32.gmra.mxu0 %v969
        %v1037 = vpop.f32.mrf.mxu0
        %v1038 = vadd.f32 0.0, %v1037
        %v1039 = vpop.f32.mrf.mxu0
        %1040 = vdwg.mxu0
        %v1041 = vrsqrt.pop %v1038
        %v1042 = vmul.f32 %v1038, %v1041
        %vm1043 = vcmp.eq.f32.partialorder %v1038, inf
        %v1044 = vsel %vm1043, %v1038, %v1042
        %vm1045 = vcmp.eq.f32.partialorder %v1038, 0.0
        %v1046 = vand.u32 %v1038, 2147483648
        %v1047 = vsel %vm1045, %v1046, %v1044
        %v1048 = vmax.f32 %v1047, 1e-05
        %v1049 = vrcp.pop %v1048
        %v1050 = vmul.f32 %v880, %v1049
        %v1051 = vld [vmem:[%s7] sm:$0xff]
        %1052 = vst.msk [vmem:[#allocation2] sm:$0xff] %vm647, 0.0
        %1053 = vst.msk [vmem:[#allocation2 + $0x8] sm:$0xff] %vm647, %v966
        %1054 = vst.msk [vmem:[#allocation3] sm:$0xff] %vm647, 0.0
        %1055 = vst.msk [vmem:[#allocation3 + $0x8] sm:$0xff] %vm647, %v1050
        %v1056 = vld [vmem:[#allocation2 + $0x8] sm:$0xff]
        %v1057 = vlaneseq
        %v1058 = vshrl.u32 %v1057, 7
        %v1059 = vsub.s32 0, %v1058
        %v1060 = vrot.slane %v1051, %v1059
        %v1061 = vmul.f32 %v1060, %v1056
        %v1062 = vadd.f32 %v1061, 0.0
        %v1063 = vld [vmem:[#allocation3 + $0x8] sm:$0xff]
        %v1064 = vmul.f32 %v1060, %v1063
        %v1065 = vadd.f32 %v1064, 0.0
        %v1066 = vld [vmem:[#allocation2 + $0x7] sm:$0xff]
        %v1067 = vlaneseq
        %v1068 = vshrl.u32 %v1067, 7
        %v1069 = vsub.s32 1, %v1068
        %v1070 = vrot.slane %v1051, %v1069
        %v1071 = vmul.f32 %v1070, %v1066
        %v1072 = vadd.f32 %v1062, %v1071
        %v1073 = vld [vmem:[#allocation3 + $0x7] sm:$0xff]
        %v1074 = vmul.f32 %v1070, %v1073
        %v1075 = vadd.f32 %v1065, %v1074
        %v1076 = vld [vmem:[#allocation2 + $0x6] sm:$0xff]
        %v1077 = vlaneseq
        %v1078 = vshrl.u32 %v1077, 7
        %v1079 = vsub.s32 2, %v1078
        %v1080 = vrot.slane %v1051, %v1079
        %v1081 = vmul.f32 %v1080, %v1076
        %v1082 = vadd.f32 %v1072, %v1081
        %v1083 = vld [vmem:[#allocation3 + $0x6] sm:$0xff]
        %v1084 = vmul.f32 %v1080, %v1083
        %v1085 = vadd.f32 %v1075, %v1084
        %v1086 = vld [vmem:[#allocation2 + $0x5] sm:$0xff]
        %v1087 = vlaneseq
        %v1088 = vshrl.u32 %v1087, 7
        %v1089 = vsub.s32 3, %v1088
        %v1090 = vrot.slane %v1051, %v1089
        %v1091 = vmul.f32 %v1090, %v1086
        %v1092 = vadd.f32 %v1082, %v1091
        %v1093 = vld [vmem:[#allocation3 + $0x5] sm:$0xff]
        %v1094 = vmul.f32 %v1090, %v1093
        %v1095 = vadd.f32 %v1085, %v1094
        %v1096 = vld [vmem:[#allocation2 + $0x4] sm:$0xff]
        %v1097 = vlaneseq
        %v1098 = vshrl.u32 %v1097, 7
        %v1099 = vsub.s32 4, %v1098
        %v1100 = vrot.slane %v1051, %v1099
        %v1101 = vmul.f32 %v1100, %v1096
        %v1102 = vadd.f32 %v1092, %v1101
        %v1103 = vld [vmem:[#allocation3 + $0x4] sm:$0xff]
        %v1104 = vmul.f32 %v1100, %v1103
        %v1105 = vadd.f32 %v1095, %v1104
        %v1106 = vld [vmem:[#allocation2 + $0x3] sm:$0xff]
        %v1107 = vlaneseq
        %v1108 = vshrl.u32 %v1107, 7
        %v1109 = vsub.s32 5, %v1108
        %v1110 = vrot.slane %v1051, %v1109
        %v1111 = vmul.f32 %v1110, %v1106
        %v1112 = vadd.f32 %v1102, %v1111
        %v1113 = vld [vmem:[#allocation3 + $0x3] sm:$0xff]
        %v1114 = vmul.f32 %v1110, %v1113
        %v1115 = vadd.f32 %v1105, %v1114
        %v1116 = vld [vmem:[#allocation2 + $0x2] sm:$0xff]
        %v1117 = vlaneseq
        %v1118 = vshrl.u32 %v1117, 7
        %v1119 = vsub.s32 6, %v1118
        %v1120 = vrot.slane %v1051, %v1119
        %v1121 = vmul.f32 %v1120, %v1116
        %v1122 = vadd.f32 %v1112, %v1121
        %v1123 = vld [vmem:[#allocation3 + $0x2] sm:$0xff]
        %v1124 = vmul.f32 %v1120, %v1123
        %v1125 = vadd.f32 %v1115, %v1124
        %v1126 = vld [vmem:[#allocation2 + $0x1] sm:$0xff]
        %v1127 = vlaneseq
        %v1128 = vshrl.u32 %v1127, 7
        %v1129 = vsub.s32 7, %v1128
        %v1130 = vrot.slane %v1051, %v1129
        %v1131 = vmul.f32 %v1130, %v1126
        %v1132 = vadd.f32 %v1122, %v1131
        %v1133 = vld [vmem:[#allocation3 + $0x1] sm:$0xff]
        %v1134 = vmul.f32 %v1130, %v1133
        %v1135 = vadd.f32 %v1125, %v1134
        %v1136 = vld [vmem:[%s8] sm:$0xff]
        %v1137 = vld [vmem:[%s8 + $0x8] sm:$0xff]
        %v1138 = vld [vmem:[%s8 + $0x10] sm:$0xff]
        %v1139 = vld [vmem:[%s8 + $0x18] sm:$0xff]
        %v1141 = vsel %vm647, %v1135, 0
        %1143 = vmatprep.subr.mxu0 0.0
        %1144 = vmatpush1.msra.mxu0 0.0
        %1145 = vmatprep.subr.mxu0 0.0
        %1146 = vmatpush1.msra.mxu0 0.0
        %1147 = vmatprep.subr.mxu0 0.0
        %1148 = vmatpush1.msra.mxu0 0.0
        %1149 = vmatprep.subr.mxu0 0.0
        %1150 = vmatpush1.msra.mxu0 0.0
        %1151 = vmatprep.subr.mxu0 0.0
        %1152 = vmatpush1.msra.mxu0 0.0
        %1153 = vmatprep.subr.mxu0 0.0
        %1154 = vmatpush1.msra.mxu0 0.0
        %1155 = vmatprep.subr.mxu0 0.0
        %1156 = vmatpush1.msra.mxu0 0.0
        %1157 = vmatprep.subr.mxu0 0.0
        %1158 = vmatpush1.msra.mxu0 0.0
        %1159 = vmatprep.subr.mxu0 0.0
        %1160 = vmatpush1.msra.mxu0 0.0
        %1161 = vmatprep.subr.mxu0 0.0
        %1162 = vmatpush1.msra.mxu0 0.0
        %1163 = vmatprep.subr.mxu0 0.0
        %1164 = vmatpush1.msra.mxu0 0.0
        %1165 = vmatprep.subr.mxu0 0.0
        %1166 = vmatpush1.msra.mxu0 0.0
        %1167 = vmatprep.subr.mxu0 0.0
        %1168 = vmatpush1.msra.mxu0 %v1139
        %1169 = vmatprep.subr.mxu0 0.0
        %1170 = vmatpush1.msra.mxu0 %v1138
        %1171 = vmatprep.subr.mxu0 0.0
        %1172 = vmatpush1.msra.mxu0 %v1137
        %1173 = vmatprep.subr.mxu0 0.0
        %1174 = vmatpush1.msra.mxu0 %v1136
        %1175 = vmatprep.subr.mxu0 0.0
        %1176 = vmatpush2.msra.mxu0 0.0
        %1177 = vmatprep.subr.mxu0 0.0
        %1178 = vmatpush2.msra.mxu0 0.0
        %1179 = vmatprep.subr.mxu0 0.0
        %1180 = vmatpush2.msra.mxu0 0.0
        %1181 = vmatprep.subr.mxu0 0.0
        %1182 = vmatpush2.msra.mxu0 0.0
        %1183 = vmatprep.subr.mxu0 0.0
        %1184 = vmatpush2.msra.mxu0 0.0
        %1185 = vmatprep.subr.mxu0 0.0
        %1186 = vmatpush2.msra.mxu0 0.0
        %1187 = vmatprep.subr.mxu0 0.0
        %1188 = vmatpush2.msra.mxu0 0.0
        %1189 = vmatprep.subr.mxu0 0.0
        %1190 = vmatpush2.msra.mxu0 0.0
        %1191 = vmatprep.subr.mxu0 0.0
        %1192 = vmatpush2.msra.mxu0 0.0
        %1193 = vmatprep.subr.mxu0 0.0
        %1194 = vmatpush2.msra.mxu0 0.0
        %1195 = vmatprep.subr.mxu0 0.0
        %1196 = vmatpush2.msra.mxu0 0.0
        %1197 = vmatprep.subr.mxu0 0.0
        %1198 = vmatpush2.msra.mxu0 0.0
        %1199 = vmatprep.subr.mxu0 0.0
        %1200 = vmatpush2.msra.mxu0 0.0
        %1201 = vmatprep.subr.mxu0 0.0
        %1202 = vmatpush2.msra.mxu0 0.0
        %1203 = vmatprep.subr.mxu0 0.0
        %1204 = vmatpush2.msra.mxu0 0.0
        %1205 = vmatprep.subr.mxu0 0.0
        %1206 = vmatpush2.msra.mxu0 0.0
        %1207 = vmatprep.mubr.f32.mxu0 0.0
        %1208 = vmatmul.mubr.f32.gmra.mxu0 %v1141
        %v1209 = vpop.f32.mrf.mxu0
        %v1210 = vadd.f32 0.0, %v1209
        %v1211 = vpop.f32.mrf.mxu0
        %1212 = vdwg.mxu0
        %v1213 = vmul.f32 %v1210, %v1132
        %s1214 = sld [smem:[#allocation4]]
        %v1215 = vstv %s1214
        %v1217 = vsel %vm647, %v1213, 0
        %1219 = vmatprep.subr.mxu0 0.0
        %1220 = vmatpush1.msra.mxu0 0.0
        %1221 = vmatprep.subr.mxu0 0.0
        %1222 = vmatpush1.msra.mxu0 0.0
        %1223 = vmatprep.subr.mxu0 0.0
        %1224 = vmatpush1.msra.mxu0 0.0
        %1225 = vmatprep.subr.mxu0 0.0
        %1226 = vmatpush1.msra.mxu0 0.0
        %1227 = vmatprep.subr.mxu0 0.0
        %1228 = vmatpush1.msra.mxu0 0.0
        %1229 = vmatprep.subr.mxu0 0.0
        %1230 = vmatpush1.msra.mxu0 0.0
        %1231 = vmatprep.subr.mxu0 0.0
        %1232 = vmatpush1.msra.mxu0 0.0
        %1233 = vmatprep.subr.mxu0 0.0
        %1234 = vmatpush1.msra.mxu0 0.0
        %1235 = vmatprep.subr.mxu0 0.0
        %1236 = vmatpush1.msra.mxu0 0.0
        %1237 = vmatprep.subr.mxu0 0.0
        %1238 = vmatpush1.msra.mxu0 0.0
        %1239 = vmatprep.subr.mxu0 0.0
        %1240 = vmatpush1.msra.mxu0 0.0
        %1241 = vmatprep.subr.mxu0 0.0
        %1242 = vmatpush1.msra.mxu0 0.0
        %1243 = vmatprep.subr.mxu0 0.0
        %1244 = vmatpush1.msra.mxu0 %v634
        %1245 = vmatprep.subr.mxu0 0.0
        %1246 = vmatpush1.msra.mxu0 %v633
        %1247 = vmatprep.subr.mxu0 0.0
        %1248 = vmatpush1.msra.mxu0 %v632
        %1249 = vmatprep.subr.mxu0 0.0
        %1250 = vmatpush1.msra.mxu0 %v631
        %1251 = vmatprep.subr.mxu0 0.0
        %1252 = vmatpush2.msra.mxu0 0.0
        %1253 = vmatprep.subr.mxu0 0.0
        %1254 = vmatpush2.msra.mxu0 0.0
        %1255 = vmatprep.subr.mxu0 0.0
        %1256 = vmatpush2.msra.mxu0 0.0
        %1257 = vmatprep.subr.mxu0 0.0
        %1258 = vmatpush2.msra.mxu0 0.0
        %1259 = vmatprep.subr.mxu0 0.0
        %1260 = vmatpush2.msra.mxu0 0.0
        %1261 = vmatprep.subr.mxu0 0.0
        %1262 = vmatpush2.msra.mxu0 0.0
        %1263 = vmatprep.subr.mxu0 0.0
        %1264 = vmatpush2.msra.mxu0 0.0
        %1265 = vmatprep.subr.mxu0 0.0
        %1266 = vmatpush2.msra.mxu0 0.0
        %1267 = vmatprep.subr.mxu0 0.0
        %1268 = vmatpush2.msra.mxu0 0.0
        %1269 = vmatprep.subr.mxu0 0.0
        %1270 = vmatpush2.msra.mxu0 0.0
        %1271 = vmatprep.subr.mxu0 0.0
        %1272 = vmatpush2.msra.mxu0 0.0
        %1273 = vmatprep.subr.mxu0 0.0
        %1274 = vmatpush2.msra.mxu0 0.0
        %1275 = vmatprep.subr.mxu0 0.0
        %1276 = vmatpush2.msra.mxu0 0.0
        %1277 = vmatprep.subr.mxu0 0.0
        %1278 = vmatpush2.msra.mxu0 0.0
        %1279 = vmatprep.subr.mxu0 0.0
        %1280 = vmatpush2.msra.mxu0 0.0
        %1281 = vmatprep.subr.mxu0 0.0
        %1282 = vmatpush2.msra.mxu0 0.0
        %1283 = vmatprep.mubr.f32.mxu0 0.0
        %1284 = vmatmul.mubr.f32.gmra.mxu0 %v1217
        %v1285 = vpop.f32.mrf.mxu0
        %v1286 = vadd.f32 %v1215, %v1285
        %v1287 = vpop.f32.mrf.mxu0
        %1288 = vdwg.mxu0
        %v1289 = vmax.f32 %v1286, 0.0
        %v1290 = vmul.f32 %v1289, %v1289
        %v1291 = vadd.f32 %v1290, 1e-05
        %vm1292 = vcmask 64512
        %v1294 = vsel %vm1292, %v635, 0
        %1296 = vmatprep.subr.mxu0 0.0
        %1297 = vmatpush1.msra.mxu0 0.0
        %1298 = vmatprep.subr.mxu0 0.0
        %1299 = vmatpush1.msra.mxu0 0.0
        %1300 = vmatprep.subr.mxu0 0.0
        %1301 = vmatpush1.msra.mxu0 0.0
        %1302 = vmatprep.subr.mxu0 0.0
        %1303 = vmatpush1.msra.mxu0 0.0
        %1304 = vmatprep.subr.mxu0 0.0
        %1305 = vmatpush1.msra.mxu0 0.0
        %1306 = vmatprep.subr.mxu0 0.0
        %1307 = vmatpush1.msra.mxu0 0.0
        %1308 = vmatprep.subr.mxu0 0.0
        %1309 = vmatpush1.msra.mxu0 0.0
        %1310 = vmatprep.subr.mxu0 0.0
        %1311 = vmatpush1.msra.mxu0 0.0
        %1312 = vmatprep.subr.mxu0 0.0
        %1313 = vmatpush1.msra.mxu0 0.0
        %1314 = vmatprep.subr.mxu0 0.0
        %1315 = vmatpush1.msra.mxu0 0.0
        %1316 = vmatprep.subr.mxu0 0.0
        %1317 = vmatpush1.msra.mxu0 0.0
        %1318 = vmatprep.subr.mxu0 0.0
        %1319 = vmatpush1.msra.mxu0 0.0
        %1320 = vmatprep.subr.mxu0 0.0
        %1321 = vmatpush1.msra.mxu0 0.0
        %1322 = vmatprep.subr.mxu0 0.0
        %1323 = vmatpush1.msra.mxu0 0.0
        %1324 = vmatprep.subr.mxu0 0.0
        %1325 = vmatpush1.msra.mxu0 0.0
        %1326 = vmatprep.subr.mxu0 0.0
        %1327 = vmatpush1.msra.mxu0 %v1291
        %1328 = vmatprep.subr.mxu0 0.0
        %1329 = vmatpush2.msra.mxu0 0.0
        %1330 = vmatprep.subr.mxu0 0.0
        %1331 = vmatpush2.msra.mxu0 0.0
        %1332 = vmatprep.subr.mxu0 0.0
        %1333 = vmatpush2.msra.mxu0 0.0
        %1334 = vmatprep.subr.mxu0 0.0
        %1335 = vmatpush2.msra.mxu0 0.0
        %1336 = vmatprep.subr.mxu0 0.0
        %1337 = vmatpush2.msra.mxu0 0.0
        %1338 = vmatprep.subr.mxu0 0.0
        %1339 = vmatpush2.msra.mxu0 0.0
        %1340 = vmatprep.subr.mxu0 0.0
        %1341 = vmatpush2.msra.mxu0 0.0
        %1342 = vmatprep.subr.mxu0 0.0
        %1343 = vmatpush2.msra.mxu0 0.0
        %1344 = vmatprep.subr.mxu0 0.0
        %1345 = vmatpush2.msra.mxu0 0.0
        %1346 = vmatprep.subr.mxu0 0.0
        %1347 = vmatpush2.msra.mxu0 0.0
        %1348 = vmatprep.subr.mxu0 0.0
        %1349 = vmatpush2.msra.mxu0 0.0
        %1350 = vmatprep.subr.mxu0 0.0
        %1351 = vmatpush2.msra.mxu0 0.0
        %1352 = vmatprep.subr.mxu0 0.0
        %1353 = vmatpush2.msra.mxu0 0.0
        %1354 = vmatprep.subr.mxu0 0.0
        %1355 = vmatpush2.msra.mxu0 0.0
        %1356 = vmatprep.subr.mxu0 0.0
        %1357 = vmatpush2.msra.mxu0 0.0
        %1358 = vmatprep.subr.mxu0 0.0
        %1359 = vmatpush2.msra.mxu0 0.0
        %1360 = vmatprep.mubr.f32.mxu0 0.0
        %1361 = vmatmul.mubr.f32.gmra.mxu0 %v1294
        %v1362 = vpop.f32.mrf.mxu0
        %v1363 = vadd.f32 0.0, %v1362
        %v1364 = vpop.f32.mrf.mxu0
        %1365 = vdwg.mxu0
        %v1366 = vmax.f32 %v1363, 1e-05
        %v1367 = vmul.f32 %v1291, %v1135
        %v1368 = vld [vmem:[%s12] sm:$0xff]
        %v1369 = vld [vmem:[%s12 + $0x8] sm:$0xff]
        %v1370 = vld [vmem:[%s12 + $0x10] sm:$0xff]
        %v1371 = vld [vmem:[%s12 + $0x18] sm:$0xff]
        %v1372 = vld [vmem:[%s12 + $0x20] sm:$0xff]
        %v1373 = vld [vmem:[%s12 + $0x28] sm:$0xff]
        %v1374 = vld [vmem:[%s12 + $0x30] sm:$0xff]
        %v1375 = vld [vmem:[%s12 + $0x38] sm:$0xff]
        %v1377 = vsel %vm647, %v1367, 0
        %1379 = vmatprep.subr.mxu0 0.0
        %1380 = vmatpush1.msra.mxu0 0.0
        %1381 = vmatprep.subr.mxu0 0.0
        %1382 = vmatpush1.msra.mxu0 0.0
        %1383 = vmatprep.subr.mxu0 0.0
        %1384 = vmatpush1.msra.mxu0 0.0
        %1385 = vmatprep.subr.mxu0 0.0
        %1386 = vmatpush1.msra.mxu0 0.0
        %1387 = vmatprep.subr.mxu0 0.0
        %1388 = vmatpush1.msra.mxu0 0.0
        %1389 = vmatprep.subr.mxu0 0.0
        %1390 = vmatpush1.msra.mxu0 0.0
        %1391 = vmatprep.subr.mxu0 0.0
        %1392 = vmatpush1.msra.mxu0 0.0
        %1393 = vmatprep.subr.mxu0 0.0
        %1394 = vmatpush1.msra.mxu0 0.0
        %1395 = vmatprep.subr.mxu0 0.0
        %1396 = vmatpush1.msra.mxu0 0.0
        %1397 = vmatprep.subr.mxu0 0.0
        %1398 = vmatpush1.msra.mxu0 0.0
        %1399 = vmatprep.subr.mxu0 0.0
        %1400 = vmatpush1.msra.mxu0 0.0
        %1401 = vmatprep.subr.mxu0 0.0
        %1402 = vmatpush1.msra.mxu0 0.0
        %1403 = vmatprep.subr.mxu0 %v1375
        %1404 = vmatpush1.msra.mxu0 %v1374
        %1405 = vmatprep.subr.mxu0 %v1373
        %1406 = vmatpush1.msra.mxu0 %v1372
        %1407 = vmatprep.subr.mxu0 %v1371
        %1408 = vmatpush1.msra.mxu0 %v1370
        %1409 = vmatprep.subr.mxu0 %v1369
        %1410 = vmatpush1.msra.mxu0 %v1368
        %1411 = vmatprep.subr.mxu0 0.0
        %1412 = vmatpush2.msra.mxu0 0.0
        %1413 = vmatprep.subr.mxu0 0.0
        %1414 = vmatpush2.msra.mxu0 0.0
        %1415 = vmatprep.subr.mxu0 0.0
        %1416 = vmatpush2.msra.mxu0 0.0
        %1417 = vmatprep.subr.mxu0 0.0
        %1418 = vmatpush2.msra.mxu0 0.0
        %1419 = vmatprep.subr.mxu0 0.0
        %1420 = vmatpush2.msra.mxu0 0.0
        %1421 = vmatprep.subr.mxu0 0.0
        %1422 = vmatpush2.msra.mxu0 0.0
        %1423 = vmatprep.subr.mxu0 0.0
        %1424 = vmatpush2.msra.mxu0 0.0
        %1425 = vmatprep.subr.mxu0 0.0
        %1426 = vmatpush2.msra.mxu0 0.0
        %1427 = vmatprep.subr.mxu0 0.0
        %1428 = vmatpush2.msra.mxu0 0.0
        %1429 = vmatprep.subr.mxu0 0.0
        %1430 = vmatpush2.msra.mxu0 0.0
        %1431 = vmatprep.subr.mxu0 0.0
        %1432 = vmatpush2.msra.mxu0 0.0
        %1433 = vmatprep.subr.mxu0 0.0
        %1434 = vmatpush2.msra.mxu0 0.0
        %1435 = vmatprep.subr.mxu0 0.0
        %1436 = vmatpush2.msra.mxu0 0.0
        %1437 = vmatprep.subr.mxu0 0.0
        %1438 = vmatpush2.msra.mxu0 0.0
        %1439 = vmatprep.subr.mxu0 0.0
        %1440 = vmatpush2.msra.mxu0 0.0
        %1441 = vmatprep.subr.mxu0 0.0
        %1442 = vmatpush2.msra.mxu0 0.0
        %1443 = vmatprep.mubr.f32.mxu0 0.0
        %1444 = vmatmul.mubr.f32.gmra.mxu0 %v1377
        %v1445 = vpop.f32.mrf.mxu0
        %v1446 = vadd.f32 0.0, %v1445
        %v1447 = vpop.f32.mrf.mxu0
        %v1448 = vadd.f32 0.0, %v1447
        %1449 = vdwg.mxu0
        %v1450 = vld [vmem:[%s13] sm:$0xff]
        %v1451 = vld [vmem:[%s13 + $0x8] sm:$0xff]
        %v1452 = vld [vmem:[%s13 + $0x10] sm:$0xff]
        %v1453 = vld [vmem:[%s13 + $0x18] sm:$0xff]
        %v1454 = vld [vmem:[%s13 + $0x20] sm:$0xff]
        %v1455 = vld [vmem:[%s13 + $0x28] sm:$0xff]
        %v1456 = vld [vmem:[%s13 + $0x30] sm:$0xff]
        %v1457 = vld [vmem:[%s13 + $0x38] sm:$0xff]
        %v1459 = vsel %vm647, %v1132, 0
        %1461 = vmatprep.subr.mxu0 0.0
        %1462 = vmatpush1.msra.mxu0 0.0
        %1463 = vmatprep.subr.mxu0 0.0
        %1464 = vmatpush1.msra.mxu0 0.0
        %1465 = vmatprep.subr.mxu0 0.0
        %1466 = vmatpush1.msra.mxu0 0.0
        %1467 = vmatprep.subr.mxu0 0.0
        %1468 = vmatpush1.msra.mxu0 0.0
        %1469 = vmatprep.subr.mxu0 0.0
        %1470 = vmatpush1.msra.mxu0 0.0
        %1471 = vmatprep.subr.mxu0 0.0
        %1472 = vmatpush1.msra.mxu0 0.0
        %1473 = vmatprep.subr.mxu0 0.0
        %1474 = vmatpush1.msra.mxu0 0.0
        %1475 = vmatprep.subr.mxu0 0.0
        %1476 = vmatpush1.msra.mxu0 0.0
        %1477 = vmatprep.subr.mxu0 0.0
        %1478 = vmatpush1.msra.mxu0 0.0
        %1479 = vmatprep.subr.mxu0 0.0
        %1480 = vmatpush1.msra.mxu0 0.0
        %1481 = vmatprep.subr.mxu0 0.0
        %1482 = vmatpush1.msra.mxu0 0.0
        %1483 = vmatprep.subr.mxu0 0.0
        %1484 = vmatpush1.msra.mxu0 0.0
        %1485 = vmatprep.subr.mxu0 %v1457
        %1486 = vmatpush1.msra.mxu0 %v1456
        %1487 = vmatprep.subr.mxu0 %v1455
        %1488 = vmatpush1.msra.mxu0 %v1454
        %1489 = vmatprep.subr.mxu0 %v1453
        %1490 = vmatpush1.msra.mxu0 %v1452
        %1491 = vmatprep.subr.mxu0 %v1451
        %1492 = vmatpush1.msra.mxu0 %v1450
        %1493 = vmatprep.subr.mxu0 0.0
        %1494 = vmatpush2.msra.mxu0 0.0
        %1495 = vmatprep.subr.mxu0 0.0
        %1496 = vmatpush2.msra.mxu0 0.0
        %1497 = vmatprep.subr.mxu0 0.0
        %1498 = vmatpush2.msra.mxu0 0.0
        %1499 = vmatprep.subr.mxu0 0.0
        %1500 = vmatpush2.msra.mxu0 0.0
        %1501 = vmatprep.subr.mxu0 0.0
        %1502 = vmatpush2.msra.mxu0 0.0
        %1503 = vmatprep.subr.mxu0 0.0
        %1504 = vmatpush2.msra.mxu0 0.0
        %1505 = vmatprep.subr.mxu0 0.0
        %1506 = vmatpush2.msra.mxu0 0.0
        %1507 = vmatprep.subr.mxu0 0.0
        %1508 = vmatpush2.msra.mxu0 0.0
        %1509 = vmatprep.subr.mxu0 0.0
        %1510 = vmatpush2.msra.mxu0 0.0
        %1511 = vmatprep.subr.mxu0 0.0
        %1512 = vmatpush2.msra.mxu0 0.0
        %1513 = vmatprep.subr.mxu0 0.0
        %1514 = vmatpush2.msra.mxu0 0.0
        %1515 = vmatprep.subr.mxu0 0.0
        %1516 = vmatpush2.msra.mxu0 0.0
        %1517 = vmatprep.subr.mxu0 0.0
        %1518 = vmatpush2.msra.mxu0 0.0
        %1519 = vmatprep.subr.mxu0 0.0
        %1520 = vmatpush2.msra.mxu0 0.0
        %1521 = vmatprep.subr.mxu0 0.0
        %1522 = vmatpush2.msra.mxu0 0.0
        %1523 = vmatprep.subr.mxu0 0.0
        %1524 = vmatpush2.msra.mxu0 0.0
        %1525 = vmatprep.mubr.f32.mxu0 0.0
        %1526 = vmatmul.mubr.f32.gmra.mxu0 %v1459
        %v1527 = vpop.f32.mrf.mxu0
        %v1528 = vadd.f32 0.0, %v1527
        %v1529 = vpop.f32.mrf.mxu0
        %v1530 = vadd.f32 0.0, %v1529
        %1531 = vdwg.mxu0
        %v1532 = vmul.f32 %v1446, %v1528
        %v1533 = vmul.f32 %v1448, %v1530
        %1534 = vmatprep.subr.mxu0 0.0
        %1535 = vmatpush1.msra.mxu0 0.0
        %1536 = vmatprep.subr.mxu0 0.0
        %1537 = vmatpush1.msra.mxu0 0.0
        %1538 = vmatprep.subr.mxu0 0.0
        %1539 = vmatpush1.msra.mxu0 0.0
        %1540 = vmatprep.subr.mxu0 0.0
        %1541 = vmatpush1.msra.mxu0 0.0
        %1542 = vmatprep.subr.mxu0 0.0
        %1543 = vmatpush1.msra.mxu0 0.0
        %1544 = vmatprep.subr.mxu0 0.0
        %1545 = vmatpush1.msra.mxu0 0.0
        %1546 = vmatprep.subr.mxu0 0.0
        %1547 = vmatpush1.msra.mxu0 0.0
        %1548 = vmatprep.subr.mxu0 0.0
        %1549 = vmatpush1.msra.mxu0 0.0
        %1550 = vmatprep.subr.mxu0 0.0
        %1551 = vmatpush1.msra.mxu0 0.0
        %1552 = vmatprep.subr.mxu0 0.0
        %1553 = vmatpush1.msra.mxu0 0.0
        %1554 = vmatprep.subr.mxu0 0.0
        %1555 = vmatpush1.msra.mxu0 0.0
        %1556 = vmatprep.subr.mxu0 0.0
        %1557 = vmatpush1.msra.mxu0 0.0
        %1558 = vmatprep.subr.mxu0 0.0
        %1559 = vmatpush1.msra.mxu0 0.0
        %1560 = vmatprep.subr.mxu0 0.0
        %1561 = vmatpush1.msra.mxu0 0.0
        %1562 = vmatprep.subr.mxu0 0.0
        %1563 = vmatpush1.msra.mxu0 0.0
        %1564 = vmatprep.subr.mxu0 %v1533
        %1565 = vmatpush1.msra.mxu0 %v1532
        %1566 = vmatprep.subr.mxu0 0.0
        %1567 = vmatpush2.msra.mxu0 0.0
        %1568 = vmatprep.subr.mxu0 0.0
        %1569 = vmatpush2.msra.mxu0 0.0
        %1570 = vmatprep.subr.mxu0 0.0
        %1571 = vmatpush2.msra.mxu0 0.0
        %1572 = vmatprep.subr.mxu0 0.0
        %1573 = vmatpush2.msra.mxu0 0.0
        %1574 = vmatprep.subr.mxu0 0.0
        %1575 = vmatpush2.msra.mxu0 0.0
        %1576 = vmatprep.subr.mxu0 0.0
        %1577 = vmatpush2.msra.mxu0 0.0
        %1578 = vmatprep.subr.mxu0 0.0
        %1579 = vmatpush2.msra.mxu0 0.0
        %1580 = vmatprep.subr.mxu0 0.0
        %1581 = vmatpush2.msra.mxu0 0.0
        %1582 = vmatprep.subr.mxu0 0.0
        %1583 = vmatpush2.msra.mxu0 0.0
        %1584 = vmatprep.subr.mxu0 0.0
        %1585 = vmatpush2.msra.mxu0 0.0
        %1586 = vmatprep.subr.mxu0 0.0
        %1587 = vmatpush2.msra.mxu0 0.0
        %1588 = vmatprep.subr.mxu0 0.0
        %1589 = vmatpush2.msra.mxu0 0.0
        %1590 = vmatprep.subr.mxu0 0.0
        %1591 = vmatpush2.msra.mxu0 0.0
        %1592 = vmatprep.subr.mxu0 0.0
        %1593 = vmatpush2.msra.mxu0 0.0
        %1594 = vmatprep.subr.mxu0 0.0
        %1595 = vmatpush2.msra.mxu0 0.0
        %1596 = vmatprep.subr.mxu0 0.0
        %1597 = vmatpush2.msra.mxu0 0.0
        %1598 = vmatprep.mubr.f32.mxu0 0.0
        %1599 = vmatmul.mubr.f32.gmra.mxu0 %v1294
        %v1600 = vpop.f32.mrf.mxu0
        %v1601 = vadd.f32 0.0, %v1600
        %v1602 = vpop.f32.mrf.mxu0
        %v1603 = vadd.f32 0.0, %v1602
        %1604 = vdwg.mxu0
        %v1606 = vsel %vm647, %v718, 0
        %1608 = vmatprep.subr.mxu0 0.0
        %1609 = vmatpush1.msra.mxu0 0.0
        %1610 = vmatprep.subr.mxu0 0.0
        %1611 = vmatpush1.msra.mxu0 0.0
        %1612 = vmatprep.subr.mxu0 0.0
        %1613 = vmatpush1.msra.mxu0 0.0
        %1614 = vmatprep.subr.mxu0 0.0
        %1615 = vmatpush1.msra.mxu0 0.0
        %1616 = vmatprep.subr.mxu0 0.0
        %1617 = vmatpush1.msra.mxu0 0.0
        %1618 = vmatprep.subr.mxu0 0.0
        %1619 = vmatpush1.msra.mxu0 0.0
        %1620 = vmatprep.subr.mxu0 0.0
        %1621 = vmatpush1.msra.mxu0 0.0
        %1622 = vmatprep.subr.mxu0 0.0
        %1623 = vmatpush1.msra.mxu0 0.0
        %1624 = vmatprep.subr.mxu0 0.0
        %1625 = vmatpush1.msra.mxu0 0.0
        %1626 = vmatprep.subr.mxu0 0.0
        %1627 = vmatpush1.msra.mxu0 0.0
        %1628 = vmatprep.subr.mxu0 0.0
        %1629 = vmatpush1.msra.mxu0 0.0
        %1630 = vmatprep.subr.mxu0 0.0
        %1631 = vmatpush1.msra.mxu0 0.0
        %1632 = vmatprep.subr.mxu0 %v1375
        %1633 = vmatpush1.msra.mxu0 %v1374
        %1634 = vmatprep.subr.mxu0 %v1373
        %1635 = vmatpush1.msra.mxu0 %v1372
        %1636 = vmatprep.subr.mxu0 %v1371
        %1637 = vmatpush1.msra.mxu0 %v1370
        %1638 = vmatprep.subr.mxu0 %v1369
        %1639 = vmatpush1.msra.mxu0 %v1368
        %1640 = vmatprep.subr.mxu0 0.0
        %1641 = vmatpush2.msra.mxu0 0.0
        %1642 = vmatprep.subr.mxu0 0.0
        %1643 = vmatpush2.msra.mxu0 0.0
        %1644 = vmatprep.subr.mxu0 0.0
        %1645 = vmatpush2.msra.mxu0 0.0
        %1646 = vmatprep.subr.mxu0 0.0
        %1647 = vmatpush2.msra.mxu0 0.0
        %1648 = vmatprep.subr.mxu0 0.0
        %1649 = vmatpush2.msra.mxu0 0.0
        %1650 = vmatprep.subr.mxu0 0.0
        %1651 = vmatpush2.msra.mxu0 0.0
        %1652 = vmatprep.subr.mxu0 0.0
        %1653 = vmatpush2.msra.mxu0 0.0
        %1654 = vmatprep.subr.mxu0 0.0
        %1655 = vmatpush2.msra.mxu0 0.0
        %1656 = vmatprep.subr.mxu0 0.0
        %1657 = vmatpush2.msra.mxu0 0.0
        %1658 = vmatprep.subr.mxu0 0.0
        %1659 = vmatpush2.msra.mxu0 0.0
        %1660 = vmatprep.subr.mxu0 0.0
        %1661 = vmatpush2.msra.mxu0 0.0
        %1662 = vmatprep.subr.mxu0 0.0
        %1663 = vmatpush2.msra.mxu0 0.0
        %1664 = vmatprep.subr.mxu0 0.0
        %1665 = vmatpush2.msra.mxu0 0.0
        %1666 = vmatprep.subr.mxu0 0.0
        %1667 = vmatpush2.msra.mxu0 0.0
        %1668 = vmatprep.subr.mxu0 0.0
        %1669 = vmatpush2.msra.mxu0 0.0
        %1670 = vmatprep.subr.mxu0 0.0
        %1671 = vmatpush2.msra.mxu0 0.0
        %1672 = vmatprep.mubr.f32.mxu0 0.0
        %1673 = vmatmul.mubr.f32.gmra.mxu0 %v1606
        %v1674 = vpop.f32.mrf.mxu0
        %v1675 = vadd.f32 0.0, %v1674
        %v1676 = vpop.f32.mrf.mxu0
        %v1677 = vadd.f32 0.0, %v1676
        %1678 = vdwg.mxu0
        %v1679 = vld [vmem:[%s14] sm:$0x3]
        %v1681 = vlaneseq
        %v1682 = vshrl.u32 %v1681, 7
        %v1683 = vsub.s32 0, %v1682
        %v1684 = vrot.slane %v1679, %v1683
        %v1685 = vlaneseq
        %v1686 = vshrl.u32 %v1685, 7
        %v1687 = vsub.s32 1, %v1686
        %v1688 = vrot.slane %v1679, %v1687
        %v1691 = vmul.f32 %v1675, %v1684
        %v1692 = vmul.f32 %v1677, %v1688
        %v1693 = vmul.f32 %v1691, %v1601
        %v1694 = vmul.f32 %v1692, %v1603
        %v1695 = vld [vmem:[%s15] sm:$0xff]
        %v1696 = vld [vmem:[%s15 + $0x8] sm:$0xff]
        %v1697 = vld [vmem:[%s15 + $0x10] sm:$0xff]
        %v1698 = vld [vmem:[%s15 + $0x18] sm:$0xff]
        %v1699 = vld [vmem:[%s15 + $0x20] sm:$0xff]
        %v1700 = vld [vmem:[%s15 + $0x28] sm:$0xff]
        %v1701 = vld [vmem:[%s15 + $0x30] sm:$0xff]
        %v1702 = vld [vmem:[%s15 + $0x38] sm:$0xff]
        %v1703 = vld [vmem:[%s15 + $0x40] sm:$0xff]
        %v1704 = vld [vmem:[%s15 + $0x48] sm:$0xff]
        %v1705 = vld [vmem:[%s15 + $0x50] sm:$0xff]
        %v1706 = vld [vmem:[%s15 + $0x58] sm:$0xff]
        %v1707 = vld [vmem:[%s15 + $0x60] sm:$0xff]
        %v1708 = vld [vmem:[%s15 + $0x68] sm:$0xff]
        %v1709 = vld [vmem:[%s15 + $0x70] sm:$0xff]
        %v1710 = vld [vmem:[%s15 + $0x78] sm:$0xff]
        %v1711 = vld [vmem:[%s15 + $0x80] sm:$0xff]
        %v1712 = vld [vmem:[%s15 + $0x88] sm:$0xff]
        %v1713 = vld [vmem:[%s15 + $0x90] sm:$0xff]
        %v1714 = vld [vmem:[%s15 + $0x98] sm:$0xff]
        %v1715 = vld [vmem:[%s15 + $0xa0] sm:$0xff]
        %v1716 = vld [vmem:[%s15 + $0xa8] sm:$0xff]
        %v1717 = vld [vmem:[%s15 + $0xb0] sm:$0xff]
        %v1718 = vld [vmem:[%s15 + $0xb8] sm:$0xff]
        %v1719 = vld [vmem:[%s15 + $0xc0] sm:$0xff]
        %v1720 = vld [vmem:[%s15 + $0xc8] sm:$0xff]
        %v1721 = vld [vmem:[%s15 + $0xd0] sm:$0xff]
        %v1722 = vld [vmem:[%s15 + $0xd8] sm:$0xff]
        %v1723 = vld [vmem:[%s15 + $0xe0] sm:$0xff]
        %v1724 = vld [vmem:[%s15 + $0xe8] sm:$0xff]
        %v1725 = vld [vmem:[%s15 + $0xf0] sm:$0xff]
        %v1726 = vld [vmem:[%s15 + $0xf8] sm:$0xff]
        %1727 = vmatprep.subr.mxu0 0.0
        %1728 = vmatpush1.msra.mxu0 %v1710
        %1729 = vmatprep.subr.mxu0 0.0
        %1730 = vmatpush1.msra.mxu0 %v1709
        %1731 = vmatprep.subr.mxu0 0.0
        %1732 = vmatpush1.msra.mxu0 %v1708
        %1733 = vmatprep.subr.mxu0 0.0
        %1734 = vmatpush1.msra.mxu0 %v1707
        %1735 = vmatprep.subr.mxu0 0.0
        %1736 = vmatpush1.msra.mxu0 %v1706
        %1737 = vmatprep.subr.mxu0 0.0
        %1738 = vmatpush1.msra.mxu0 %v1705
        %1739 = vmatprep.subr.mxu0 0.0
        %1740 = vmatpush1.msra.mxu0 %v1704
        %1741 = vmatprep.subr.mxu0 0.0
        %1742 = vmatpush1.msra.mxu0 %v1703
        %1743 = vmatprep.subr.mxu0 0.0
        %1744 = vmatpush1.msra.mxu0 %v1702
        %1745 = vmatprep.subr.mxu0 0.0
        %1746 = vmatpush1.msra.mxu0 %v1701
        %1747 = vmatprep.subr.mxu0 0.0
        %1748 = vmatpush1.msra.mxu0 %v1700
        %1749 = vmatprep.subr.mxu0 0.0
        %1750 = vmatpush1.msra.mxu0 %v1699
        %1751 = vmatprep.subr.mxu0 0.0
        %1752 = vmatpush1.msra.mxu0 %v1698
        %1753 = vmatprep.subr.mxu0 0.0
        %1754 = vmatpush1.msra.mxu0 %v1697
        %1755 = vmatprep.subr.mxu0 0.0
        %1756 = vmatpush1.msra.mxu0 %v1696
        %1757 = vmatprep.subr.mxu0 0.0
        %1758 = vmatpush1.msra.mxu0 %v1695
        %1759 = vmatprep.subr.mxu0 0.0
        %1760 = vmatpush2.msra.mxu0 %v1726
        %1761 = vmatprep.subr.mxu0 0.0
        %1762 = vmatpush2.msra.mxu0 %v1725
        %1763 = vmatprep.subr.mxu0 0.0
        %1764 = vmatpush2.msra.mxu0 %v1724
        %1765 = vmatprep.subr.mxu0 0.0
        %1766 = vmatpush2.msra.mxu0 %v1723
        %1767 = vmatprep.subr.mxu0 0.0
        %1768 = vmatpush2.msra.mxu0 %v1722
        %1769 = vmatprep.subr.mxu0 0.0
        %1770 = vmatpush2.msra.mxu0 %v1721
        %1771 = vmatprep.subr.mxu0 0.0
        %1772 = vmatpush2.msra.mxu0 %v1720
        %1773 = vmatprep.subr.mxu0 0.0
        %1774 = vmatpush2.msra.mxu0 %v1719
        %1775 = vmatprep.subr.mxu0 0.0
        %1776 = vmatpush2.msra.mxu0 %v1718
        %1777 = vmatprep.subr.mxu0 0.0
        %1778 = vmatpush2.msra.mxu0 %v1717
        %1779 = vmatprep.subr.mxu0 0.0
        %1780 = vmatpush2.msra.mxu0 %v1716
        %1781 = vmatprep.subr.mxu0 0.0
        %1782 = vmatpush2.msra.mxu0 %v1715
        %1783 = vmatprep.subr.mxu0 0.0
        %1784 = vmatpush2.msra.mxu0 %v1714
        %1785 = vmatprep.subr.mxu0 0.0
        %1786 = vmatpush2.msra.mxu0 %v1713
        %1787 = vmatprep.subr.mxu0 0.0
        %1788 = vmatpush2.msra.mxu0 %v1712
        %1789 = vmatprep.subr.mxu0 0.0
        %1790 = vmatpush2.msra.mxu0 %v1711
        %1791 = vmatprep.mubr.f32.mxu0 %v1694
        %1792 = vmatmul.mubr.f32.gmra.mxu0 %v1693
        %v1793 = vpop.f32.mrf.mxu0
        %v1794 = vadd.f32 0.0, %v1793
        %v1795 = vpop.f32.mrf.mxu0
        %1796 = vdwg.mxu0
        %v1797 = vrcp.pop %v1366
        %v1798 = vmul.f32 %v1794, %v1797
        %v1799 = vmul.f32 %v1798, %v1798
        %v1801 = vsel %vm647, %v1799, 0
        %1803 = vmatprep.subr.mxu0 0.0
        %1804 = vmatpush1.msra.mxu0 0.0
        %1805 = vmatprep.subr.mxu0 0.0
        %1806 = vmatpush1.msra.mxu0 0.0
        %1807 = vmatprep.subr.mxu0 0.0
        %1808 = vmatpush1.msra.mxu0 0.0
        %1809 = vmatprep.subr.mxu0 0.0
        %1810 = vmatpush1.msra.mxu0 0.0
        %1811 = vmatprep.subr.mxu0 0.0
        %1812 = vmatpush1.msra.mxu0 0.0
        %1813 = vmatprep.subr.mxu0 0.0
        %1814 = vmatpush1.msra.mxu0 0.0
        %1815 = vmatprep.subr.mxu0 0.0
        %1816 = vmatpush1.msra.mxu0 0.0
        %1817 = vmatprep.subr.mxu0 0.0
        %1818 = vmatpush1.msra.mxu0 0.0
        %1819 = vmatprep.subr.mxu0 0.0
        %1820 = vmatpush1.msra.mxu0 0.0
        %1821 = vmatprep.subr.mxu0 0.0
        %1822 = vmatpush1.msra.mxu0 0.0
        %1823 = vmatprep.subr.mxu0 0.0
        %1824 = vmatpush1.msra.mxu0 0.0
        %1825 = vmatprep.subr.mxu0 0.0
        %1826 = vmatpush1.msra.mxu0 0.0
        %1827 = vmatprep.subr.mxu0 0.0
        %1828 = vmatpush1.msra.mxu0 %v634
        %1829 = vmatprep.subr.mxu0 0.0
        %1830 = vmatpush1.msra.mxu0 %v633
        %1831 = vmatprep.subr.mxu0 0.0
        %1832 = vmatpush1.msra.mxu0 %v632
        %1833 = vmatprep.subr.mxu0 0.0
        %1834 = vmatpush1.msra.mxu0 %v631
        %1835 = vmatprep.subr.mxu0 0.0
        %1836 = vmatpush2.msra.mxu0 0.0
        %1837 = vmatprep.subr.mxu0 0.0
        %1838 = vmatpush2.msra.mxu0 0.0
        %1839 = vmatprep.subr.mxu0 0.0
        %1840 = vmatpush2.msra.mxu0 0.0
        %1841 = vmatprep.subr.mxu0 0.0
        %1842 = vmatpush2.msra.mxu0 0.0
        %1843 = vmatprep.subr.mxu0 0.0
        %1844 = vmatpush2.msra.mxu0 0.0
        %1845 = vmatprep.subr.mxu0 0.0
        %1846 = vmatpush2.msra.mxu0 0.0
        %1847 = vmatprep.subr.mxu0 0.0
        %1848 = vmatpush2.msra.mxu0 0.0
        %1849 = vmatprep.subr.mxu0 0.0
        %1850 = vmatpush2.msra.mxu0 0.0
        %1851 = vmatprep.subr.mxu0 0.0
        %1852 = vmatpush2.msra.mxu0 0.0
        %1853 = vmatprep.subr.mxu0 0.0
        %1854 = vmatpush2.msra.mxu0 0.0
        %1855 = vmatprep.subr.mxu0 0.0
        %1856 = vmatpush2.msra.mxu0 0.0
        %1857 = vmatprep.subr.mxu0 0.0
        %1858 = vmatpush2.msra.mxu0 0.0
        %1859 = vmatprep.subr.mxu0 0.0
        %1860 = vmatpush2.msra.mxu0 0.0
        %1861 = vmatprep.subr.mxu0 0.0
        %1862 = vmatpush2.msra.mxu0 0.0
        %1863 = vmatprep.subr.mxu0 0.0
        %1864 = vmatpush2.msra.mxu0 0.0
        %1865 = vmatprep.subr.mxu0 0.0
        %1866 = vmatpush2.msra.mxu0 0.0
        %1867 = vmatprep.mubr.f32.mxu0 0.0
        %1868 = vmatmul.mubr.f32.gmra.mxu0 %v1801
        %v1869 = vpop.f32.mrf.mxu0
        %v1870 = vadd.f32 0.0, %v1869
        %v1871 = vpop.f32.mrf.mxu0
        %1872 = vdwg.mxu0
        %v1873 = vrsqrt.pop %v1870
        %v1874 = vmul.f32 %v1870, %v1873
        %vm1875 = vcmp.eq.f32.partialorder %v1870, inf
        %v1876 = vsel %vm1875, %v1870, %v1874
        %vm1877 = vcmp.eq.f32.partialorder %v1870, 0.0
        %v1878 = vand.u32 %v1870, 2147483648
        %v1879 = vsel %vm1877, %v1878, %v1876
        %v1880 = vmax.f32 %v1879, 1e-05
        %v1881 = vrcp.pop %v1880
        %v1882 = vmul.f32 %v1798, %v1881
        %v1883 = vld [vmem:[%s16] sm:$0xff]
        %v1884 = vld [vmem:[%s16 + $0x8] sm:$0xff]
        %v1885 = vld [vmem:[%s16 + $0x10] sm:$0xff]
        %v1886 = vld [vmem:[%s16 + $0x18] sm:$0xff]
        %v1887 = vld [vmem:[%s17] sm:$0x1]
        %v1889 = vlaneseq
        %v1890 = vshrl.u32 %v1889, 7
        %v1891 = vsub.s32 0, %v1890
        %v1892 = vrot.slane %v1887, %v1891
        %v1895 = vsel %vm647, %v1882, 0
        %1897 = vmatprep.subr.mxu0 0.0
        %1898 = vmatpush1.msra.mxu0 0.0
        %1899 = vmatprep.subr.mxu0 0.0
        %1900 = vmatpush1.msra.mxu0 0.0
        %1901 = vmatprep.subr.mxu0 0.0
        %1902 = vmatpush1.msra.mxu0 0.0
        %1903 = vmatprep.subr.mxu0 0.0
        %1904 = vmatpush1.msra.mxu0 0.0
        %1905 = vmatprep.subr.mxu0 0.0
        %1906 = vmatpush1.msra.mxu0 0.0
        %1907 = vmatprep.subr.mxu0 0.0
        %1908 = vmatpush1.msra.mxu0 0.0
        %1909 = vmatprep.subr.mxu0 0.0
        %1910 = vmatpush1.msra.mxu0 0.0
        %1911 = vmatprep.subr.mxu0 0.0
        %1912 = vmatpush1.msra.mxu0 0.0
        %1913 = vmatprep.subr.mxu0 0.0
        %1914 = vmatpush1.msra.mxu0 0.0
        %1915 = vmatprep.subr.mxu0 0.0
        %1916 = vmatpush1.msra.mxu0 0.0
        %1917 = vmatprep.subr.mxu0 0.0
        %1918 = vmatpush1.msra.mxu0 0.0
        %1919 = vmatprep.subr.mxu0 0.0
        %1920 = vmatpush1.msra.mxu0 0.0
        %1921 = vmatprep.subr.mxu0 0.0
        %1922 = vmatpush1.msra.mxu0 %v1886
        %1923 = vmatprep.subr.mxu0 0.0
        %1924 = vmatpush1.msra.mxu0 %v1885
        %1925 = vmatprep.subr.mxu0 0.0
        %1926 = vmatpush1.msra.mxu0 %v1884
        %1927 = vmatprep.subr.mxu0 0.0
        %1928 = vmatpush1.msra.mxu0 %v1883
        %1929 = vmatprep.subr.mxu0 0.0
        %1930 = vmatpush2.msra.mxu0 0.0
        %1931 = vmatprep.subr.mxu0 0.0
        %1932 = vmatpush2.msra.mxu0 0.0
        %1933 = vmatprep.subr.mxu0 0.0
        %1934 = vmatpush2.msra.mxu0 0.0
        %1935 = vmatprep.subr.mxu0 0.0
        %1936 = vmatpush2.msra.mxu0 0.0
        %1937 = vmatprep.subr.mxu0 0.0
        %1938 = vmatpush2.msra.mxu0 0.0
        %1939 = vmatprep.subr.mxu0 0.0
        %1940 = vmatpush2.msra.mxu0 0.0
        %1941 = vmatprep.subr.mxu0 0.0
        %1942 = vmatpush2.msra.mxu0 0.0
        %1943 = vmatprep.subr.mxu0 0.0
        %1944 = vmatpush2.msra.mxu0 0.0
        %1945 = vmatprep.subr.mxu0 0.0
        %1946 = vmatpush2.msra.mxu0 0.0
        %1947 = vmatprep.subr.mxu0 0.0
        %1948 = vmatpush2.msra.mxu0 0.0
        %1949 = vmatprep.subr.mxu0 0.0
        %1950 = vmatpush2.msra.mxu0 0.0
        %1951 = vmatprep.subr.mxu0 0.0
        %1952 = vmatpush2.msra.mxu0 0.0
        %1953 = vmatprep.subr.mxu0 0.0
        %1954 = vmatpush2.msra.mxu0 0.0
        %1955 = vmatprep.subr.mxu0 0.0
        %1956 = vmatpush2.msra.mxu0 0.0
        %1957 = vmatprep.subr.mxu0 0.0
        %1958 = vmatpush2.msra.mxu0 0.0
        %1959 = vmatprep.subr.mxu0 0.0
        %1960 = vmatpush2.msra.mxu0 0.0
        %1961 = vmatprep.mubr.f32.mxu0 0.0
        %1962 = vmatmul.mubr.f32.gmra.mxu0 %v1895
        %v1963 = vpop.f32.mrf.mxu0
        %v1964 = vadd.f32 %v1892, %v1963
        %v1965 = vpop.f32.mrf.mxu0
        %1966 = vdwg.mxu0
        %1967 = vst.msk [vmem:[%s629] sm:$0xff] %vm647, %v1964
        %s1968 = sand.u32 %s429, 1
        %s1969 = scalar_lea.sflag [#allocation7], %s1968
        %s1970 = sand.u32 %s429, 1
        %s1971 = smul.addr %s1970, 8
        %s1972 = scalar_lea.vmem [#allocation13], %s1971
        // Predicated region
        $region109: #{tpu_custom_call.1} parent=91 // pred_check
          %p1973 = pneg %p439
        $region110: #{tpu_custom_call.1} parent=91 // pred_check_branch
          %1975 = sbr.rel (%p1973) target = $region112
        $region111: #{tpu_custom_call.1} parent=91 // pred_region
          %s1977 = ssub.s32 128, 128
          %1978 = vsyncadd %s1969, %s1977
          %s1979 = smul.addr %s38, 128
          %s1980 = scalar_lea.hbm %s18, %s1979
          %s1982 = sshll.u32 %s1972, 4
          %s1983 = int_to_ptr.vmem [resolvable:$true] %s1982
          %1985 = dma.vmem_to_hbm [thread:$0]  %s1983, 128, %s1980, %s1969
        $region112: #{tpu_custom_call.1} parent=91 // pred_fallthru
          _
      $region92: #{tpu_custom_call.1} parent=5 // pred_fallthru
        _
      %p1986 = scmp.le.s32.totalorder 2, %s33
      // Predicated region
      $region113: #{tpu_custom_call.1} parent=5 // pred_check
        %p1987 = pneg %p1986
      $region114: #{tpu_custom_call.1} parent=5 // pred_check_branch
        %1989 = sbr.rel (%p1987) target = $region116
      $region115: #{tpu_custom_call.1} parent=5 // pred_region
        %s1990 = ssub.s32 %s33, 2
        // Predicated region
        $region117: #{tpu_custom_call.1} parent=115 // pred_check
          %p1991 = pneg %p445
        $region118: #{tpu_custom_call.1} parent=115 // pred_check_branch
          %1993 = sbr.rel (%p1991) target = $region120
        $region119: #{tpu_custom_call.1} parent=115 // pred_region
          %s1994 = sand.u32 %s430, 1
          %s1995 = scalar_lea.sflag [#allocation7], %s1994
          %s1996 = sand.u32 %s430, 1
          %s1997 = smul.addr %s1996, 8
          %s1998 = scalar_lea.vmem [#allocation13], %s1997
          %1999 = dma.done %s1995, 128
        $region120: #{tpu_custom_call.1} parent=115 // pred_fallthru
          _
      $region116: #{tpu_custom_call.1} parent=5 // pred_fallthru
        _
    $region6: #{tpu_custom_call.1} parent=1 // loop_footer
      %s37 = sadd.s32 1, %s33
    $region7: #{tpu_custom_call.1} parent=1 // loop_footer_branch
      %32 = sbr.rel target = $region3
    $region8: #{tpu_custom_call.1} parent=1 // loop_exit
      _
    %2000 = vsyncpa [#allocation6], 1
    %s2001 = scalar_lea.sflag [#allocation6], 1
    %2002 = vsyncpa %s2001, 1
    %2003 = vsyncpa [#allocation9], 1
    %2004 = vsyncpa [#allocation12], 1
    %2005 = vsyncpa [#allocation7], 1
    %s2006 = scalar_lea.sflag [#allocation7], 1
    %2007 = vsyncpa %s2006, 1

</llo_original>
